<compile_context>
chip_gen: v7x
topology: tpu7x:2x2x1
jax: 0.10.0
libtpu: 0.0.40
codegen_flags: <defaults>
</compile_context>

<pallas_src>
import jax
import jax.numpy as jnp
from jax.experimental import pallas as pl
from jax.experimental.pallas import tpu as pltpu


def _round_up(n, m):
    return ((n + m - 1) // m) * m


# ---------------------------------------------------------------------------
# Kernel 1: weights fully resident in VMEM (single-buffered), grid over batch.
# ---------------------------------------------------------------------------
def decoder_kernel_resident(x_ref, w1_ref, b1_ref, w2_ref, b2_ref, o_ref):
    """sigmoid(relu(x @ W1 + b1) @ W2 + b2) for one batch tile."""
    # x arrives as f32 straight from HBM; cast to bf16 in-kernel (4 B/elem of
    # x traffic instead of 8 B/elem with a wrapper-side pre-cast).
    x = x_ref[...].astype(jnp.bfloat16)

    # Layer 1: MXU matmul (bf16 in, f32 acc) + bias + ReLU (VPU).
    h = jnp.dot(x, w1_ref[...], preferred_element_type=jnp.float32)
    h = jnp.maximum(h + b1_ref[...], 0.0)              # (1, D_hid) broadcasts

    # Layer 2: bf16 operands again, f32 accumulation.
    y = jnp.dot(h.astype(jnp.bfloat16), w2_ref[...],
                preferred_element_type=jnp.float32)
    y = y + b2_ref[...]

    # sigmoid via tanh identity: single EUP push + one VPU FMA.
    o_ref[...] = (0.5 * jnp.tanh(0.5 * y) + 0.5).astype(o_ref.dtype)


# ---------------------------------------------------------------------------
# Kernel 2: hidden-dim tiled weights (v7x / production widths), grid over
# (batch tile, hidden tile) with an f32 accumulator in VMEM scratch.
# ---------------------------------------------------------------------------
def decoder_kernel_ktiled(x_ref, w1_ref, b1_ref, w2_ref, b2_ref, o_ref, acc_ref):
    k = pl.program_id(1)

    @pl.when(k == 0)
    def _():
        acc_ref[...] = jnp.zeros_like(acc_ref)

    x = x_ref[...].astype(jnp.bfloat16)
    h = jnp.dot(x, w1_ref[...], preferred_element_type=jnp.float32)
    h = jnp.maximum(h + b1_ref[...], 0.0)
    acc_ref[...] += jnp.dot(h.astype(jnp.bfloat16), w2_ref[...],
                            preferred_element_type=jnp.float32)

    @pl.when(k == pl.num_programs(1) - 1)
    def _():
        y = acc_ref[...] + b2_ref[...]
        o_ref[...] = (0.5 * jnp.tanh(0.5 * y) + 0.5).astype(o_ref.dtype)


# ---------------------------------------------------------------------------
# Wrapper
# ---------------------------------------------------------------------------
def _vmem_cap_bytes():
    """Physical per-core VMEM minus headroom for compiler-internal scratch."""
    try:
        phys = int(getattr(pltpu.get_tpu_info(), "vmem_capacity_bytes", 64 << 20))
    except Exception:
        phys = 64 << 20          # conservative fallback: v7x per-TC VMEM
    return max(phys - (16 << 20), 16 << 20)


def _pick_tile_b(B):
    # Big batch tiles amortize the ~0.35us/grid-step overhead, but keep >= 2
    # grid steps when B allows so both v7x TensorCores get work off the
    # "parallel" batch axis.  Multiple of 8 (sublane) so ragged blocks are ok.
    tile_b = 512
    while tile_b > 128 and pl.cdiv(B, tile_b) < 2:
        tile_b //= 2
    return min(tile_b, _round_up(B, 8))


def _pick_tile_k(D_hid, D_in, D_out, vmem_cap):
    """Largest multiple-of-128 divisor of D_hid whose double-buffered W1/W2
    slabs fit in about half the VMEM budget."""
    budget = max(vmem_cap // 2, 4 << 20)
    per_col = 2 * (D_in + D_out) * 2          # 2 pipeline buffers x bf16 slabs
    max_tile = max(128, min(D_hid, (budget // per_col) // 128 * 128))
    t = (max_tile // 128) * 128
    while t >= 128:
        if D_hid % t == 0:
            return t
        t -= 128
    return None


def decoder_forward(x, w1, b1, w2, b2, *, tile_b=None, tile_k=None,
                    out_dtype=jnp.bfloat16):
    """Fused Decoder forward: sigmoid(relu(x @ W1 + b1) @ W2 + b2).

    Expects W1/W2 pre-transposed to [D_in, D_out]; ideally stored persistently
    in bf16 and b1/b2 as (1, D) f32 (the astype below is then a no-op).
    x stays f32 and is cast to bf16 inside the kernel.
    """
    B, D_in = x.shape
    D_hid = w1.shape[1]
    D_out = w2.shape[1]

    w1 = w1.astype(jnp.bfloat16)
    w2 = w2.astype(jnp.bfloat16)
    b1 = b1.reshape(1, D_hid).astype(jnp.float32)
    b2 = b2.reshape(1, D_out).astype(jnp.float32)

    if tile_b is None:
        tile_b = _pick_tile_b(B)
    # Ragged last batch tile handled by Pallas partial-block masking (garbage
    # rows never cross into valid rows; OOB stores are dropped) — no pad/slice.
    grid_b = pl.cdiv(B, tile_b)

    f32_b, bf16_b = 4, 2
    out_b = jnp.dtype(out_dtype).itemsize
    weight_bytes = (D_in * D_hid + D_hid * D_out) * bf16_b + (D_hid + D_out) * f32_b
    vmem_cap = _vmem_cap_bytes()

    # Switch to the hidden-tiled path once single-buffered resident weights
    # would exceed ~20 MiB (hits first on v7x's 64 MiB VMEM).
    use_ktiled = tile_k is not None or weight_bytes > (20 << 20)

    if not use_ktiled:
        resident = (
            weight_bytes                          # W1/b1/W2/b2, Buffered(1)
            + 2 * tile_b * D_in * f32_b           # x tile (f32, double-buffered)
            + 2 * tile_b * D_out * out_b          # out tile (double-buffered)
            + tile_b * D_in * bf16_b              # in-kernel bf16 copy of x
            + tile_b * D_hid * (f32_b + bf16_b)   # hidden activation (f32+bf16)
            + tile_b * D_out * f32_b              # f32 y before sigmoid
        )
        vmem_limit = int(min(resident + (8 << 20), vmem_cap))

        return pl.pallas_call(
            decoder_kernel_resident,
            out_shape=jax.ShapeDtypeStruct((B, D_out), out_dtype),
            grid_spec=pltpu.PrefetchScalarGridSpec(
                num_scalar_prefetch=0,
                grid=(grid_b,),
                in_specs=[
                    pl.BlockSpec((tile_b, D_in), lambda i: (i, 0)),
                    # Constant-index operands: single-buffered (halves VMEM).
                    pl.BlockSpec((D_in, D_hid), lambda i: (0, 0),
                                 pipeline_mode=pl.Buffered(1)),
                    pl.BlockSpec((1, D_hid), lambda i: (0, 0),
                                 pipeline_mode=pl.Buffered(1)),
                    pl.BlockSpec((D_hid, D_out), lambda i: (0, 0),
                                 pipeline_mode=pl.Buffered(1)),
                    pl.BlockSpec((1, D_out), lambda i: (0, 0),
                                 pipeline_mode=pl.Buffered(1)),
                ],
                out_specs=pl.BlockSpec((tile_b, D_out), lambda i: (i, 0)),
            ),
            compiler_params=pltpu.CompilerParams(
                dimension_semantics=("parallel",),
                vmem_limit_bytes=vmem_limit,
            ),
        )(x, w1, b1, w2, b2)

    # ---------------- hidden-tiled path ----------------
    if tile_k is None:
        tile_k = _pick_tile_k(D_hid, D_in, D_out, vmem_cap)
    if tile_k is None or D_hid % tile_k != 0:
        # TODO(synk): mask a ragged hidden tile; for now require divisibility.
        raise ValueError(f"D_hid={D_hid} needs a multiple-of-128 tile_k divisor")
    grid_k = D_hid // tile_k

    resident = (
        2 * tile_b * D_in * f32_b                        # x tile
        + 2 * (D_in * tile_k + tile_k * D_out) * bf16_b  # W1/W2 hidden slabs
        + 2 * tile_k * f32_b + D_out * f32_b             # b1 slabs + b2
        + 2 * tile_b * D_out * out_b                     # out tile
        + tile_b * D_out * f32_b                         # f32 accumulator
        + tile_b * D_in * bf16_b                         # bf16 copy of x
        + tile_b * tile_k * (f32_b + bf16_b)             # hidden slab (f32+bf16)
    )
    vmem_limit = int(min(resident + (8 << 20), vmem_cap))

    return pl.pallas_call(
        decoder_kernel_ktiled,
        out_shape=jax.ShapeDtypeStruct((B, D_out), out_dtype),
        grid_spec=pltpu.PrefetchScalarGridSpec(
            num_scalar_prefetch=0,
            grid=(grid_b, grid_k),
            in_specs=[
                pl.BlockSpec((tile_b, D_in), lambda i, k: (i, 0)),
                pl.BlockSpec((D_in, tile_k), lambda i, k: (0, k)),
                pl.BlockSpec((1, tile_k), lambda i, k: (0, k)),
                pl.BlockSpec((tile_k, D_out), lambda i, k: (k, 0)),
                pl.BlockSpec((1, D_out), lambda i, k: (0, 0),
                             pipeline_mode=pl.Buffered(1)),
            ],
            out_specs=pl.BlockSpec((tile_b, D_out), lambda i, k: (i, 0)),
            scratch_shapes=[pltpu.VMEM((tile_b, D_out), jnp.float32)],
        ),
        compiler_params=pltpu.CompilerParams(
            dimension_semantics=("parallel", "arbitrary"),
            vmem_limit_bytes=vmem_limit,
        ),
    )(x, w1, b1, w2, b2)


# ---------------------------------------------------------------------------
# References
# ---------------------------------------------------------------------------
def decoder_reference_f32(x, w1, b1, w2, b2):
    h = jnp.maximum(x @ w1 + b1, 0.0)
    return jax.nn.sigmoid(h @ w2 + b2)


def decoder_reference_bf16(x, w1, b1, w2, b2):
    """Same compute path as the kernels (bf16 operands, f32 accumulation)."""
    xb = x.astype(jnp.bfloat16)
    h = jnp.dot(xb, w1.astype(jnp.bfloat16), preferred_element_type=jnp.float32)
    h = jnp.maximum(h + b1, 0.0).astype(jnp.bfloat16)
    y = jnp.dot(h, w2.astype(jnp.bfloat16), preferred_element_type=jnp.float32)
    return jax.nn.sigmoid(y + b2)


if __name__ == "__main__":
    # Modest demo shapes: lane-friendly feature dims (multiples of 128) and a
    # batch that is NOT a multiple of the batch tile, so the ragged last block
    # (masked partial stores, no jnp.pad / out[:B]) is exercised.
    B, D_IN, D_HID, D_OUT = 200, 256, 512, 256

    key = jax.random.PRNGKey(0)
    kx, k1, kb1, k2, kb2 = jax.random.split(key, 5)

    x = jax.random.normal(kx, (B, D_IN), dtype=jnp.float32)

    # nn.Linear-equivalent params (PyTorch stores [out, in]; kept pre-transposed
    # as [in, out] so the kernel does plain x @ W + b).
    w1 = jax.random.normal(k1, (D_IN, D_HID), dtype=jnp.float32) * (1.0 / jnp.sqrt(D_IN))
    b1 = jax.random.normal(kb1, (1, D_HID), dtype=jnp.float32) * 0.01
    w2 = jax.random.normal(k2, (D_HID, D_OUT), dtype=jnp.float32) * (1.0 / jnp.sqrt(D_HID))
    b2 = jax.random.normal(kb2, (1, D_OUT), dtype=jnp.float32) * 0.01

    # Hoisted one-time weight conversion (weights live persistently in bf16 —
    # no per-call HBM pass over the weight matrices).
    w1_bf = jax.block_until_ready(w1.astype(jnp.bfloat16))
    w2_bf = jax.block_until_ready(w2.astype(jnp.bfloat16))

    # Path 1: resident-weight kernel (auto tile_b, weights single-buffered).
    out = jax.block_until_ready(decoder_forward(x, w1_bf, b1, w2_bf, b2))
    assert out.shape == (B, D_OUT) and out.dtype == jnp.bfloat16
    out_f32 = out.astype(jnp.float32)

    # Loose check vs. pure-f32 reference (bf16 operand rounding dominates).
    ref32 = decoder_reference_f32(x, w1, b1, w2, b2)
    err32 = float(jnp.max(jnp.abs(out_f32 - ref32)))
    assert err32 < 5e-2, err32

    # Tighter check vs. the matched bf16-compute-path reference (slack covers
    # the bf16 output rounding).
    ref16 = decoder_reference_bf16(x, w1, b1, w2, b2)
    err16 = float(jnp.max(jnp.abs(out_f32 - ref16)))
    assert err16 < 1e-2, err16

    # Path 2: hidden-tiled kernel (the one v7x needs once resident weights
    # exceed ~20 MiB); forced here with a small tile_k so it stays exercised.
    out_t = jax.block_until_ready(decoder_forward(x, w1_bf, b1, w2_bf, b2, tile_k=256))
    out_t_f32 = out_t.astype(jnp.float32)
    err_t = float(jnp.max(jnp.abs(out_t_f32 - ref16)))
    assert err_t < 1e-2, err_t
    assert float(jnp.max(jnp.abs(out_t_f32 - out_f32))) < 8e-3

    print("KERNEL_OK")
</pallas_src>

<mosaic_0001>
module attributes {stable_mosaic.version = 11 : i64} {
  func.func @decoder_kernel_resident(%arg0: i32, %arg1: memref<128x256xf32, #tpu.memory_space<vmem>>, %arg2: memref<256x512xbf16, #tpu.memory_space<vmem>>, %arg3: memref<1x512xf32, #tpu.memory_space<vmem>>, %arg4: memref<512x256xbf16, #tpu.memory_space<vmem>>, %arg5: memref<1x256xf32, #tpu.memory_space<vmem>>, %arg6: memref<128x256xbf16, #tpu.memory_space<vmem>>) attributes {dimension_semantics = [#tpu.dimension_semantics<parallel>], iteration_bounds = array<i64: 2>, scalar_prefetch = 0 : i64, scratch_operands = 0 : i64, tpu.core_type = #tpu.core_type<tc>, window_params = [{transform_indices = @transform_0, window_bounds = array<i64: 128, 256>}, {pipeline_mode = #tpu.pipeline_mode<synchronous>, transform_indices = @transform_1, window_bounds = array<i64: 256, 512>}, {pipeline_mode = #tpu.pipeline_mode<synchronous>, transform_indices = @transform_2, window_bounds = array<i64: 1, 512>}, {pipeline_mode = #tpu.pipeline_mode<synchronous>, transform_indices = @transform_3, window_bounds = array<i64: 512, 256>}, {pipeline_mode = #tpu.pipeline_mode<synchronous>, transform_indices = @transform_4, window_bounds = array<i64: 1, 256>}, {transform_indices = @transform_5, window_bounds = array<i64: 128, 256>}]} {
    %c0 = arith.constant 0 : index
    %c0_0 = arith.constant 0 : index
    %0 = vector.load %arg1[%c0, %c0_0] : memref<128x256xf32, #tpu.memory_space<vmem>>, vector<128x256xf32>
    %1 = arith.truncf %0 : vector<128x256xf32> to vector<128x256xbf16>
    %c0_1 = arith.constant 0 : index
    %c0_2 = arith.constant 0 : index
    %2 = vector.load %arg2[%c0_1, %c0_2] : memref<256x512xbf16, #tpu.memory_space<vmem>>, vector<256x512xbf16>
    %cst = arith.constant dense<0.000000e+00> : vector<128x512xf32>
    %3 = tpu.matmul %1, %2, %cst {dimension_numbers = #tpu.dot_dimension_numbers<[1], [0], [0], [1], [0, 0, 1, 1], [], []>} : vector<128x256xbf16>, vector<256x512xbf16>, vector<128x512xf32> -> vector<128x512xf32>
    %c0_3 = arith.constant 0 : index
    %c0_4 = arith.constant 0 : index
    %4 = vector.load %arg3[%c0_3, %c0_4] : memref<1x512xf32, #tpu.memory_space<vmem>>, vector<1x512xf32>
    %5 = vector.broadcast %4 : vector<1x512xf32> to vector<128x512xf32>
    %6 = arith.addf %3, %5 : vector<128x512xf32>
    %cst_5 = arith.constant 0.000000e+00 : f32
    %7 = vector.broadcast %cst_5 : f32 to vector<128x512xf32>
    %8 = arith.maximumf %6, %7 : vector<128x512xf32>
    %9 = arith.truncf %8 : vector<128x512xf32> to vector<128x512xbf16>
    %c0_6 = arith.constant 0 : index
    %c0_7 = arith.constant 0 : index
    %10 = vector.load %arg4[%c0_6, %c0_7] : memref<512x256xbf16, #tpu.memory_space<vmem>>, vector<512x256xbf16>
    %cst_8 = arith.constant dense<0.000000e+00> : vector<128x256xf32>
    %11 = tpu.matmul %9, %10, %cst_8 {dimension_numbers = #tpu.dot_dimension_numbers<[1], [0], [0], [1], [0, 0, 1, 1], [], []>} : vector<128x512xbf16>, vector<512x256xbf16>, vector<128x256xf32> -> vector<128x256xf32>
    %c0_9 = arith.constant 0 : index
    %c0_10 = arith.constant 0 : index
    %12 = vector.load %arg5[%c0_9, %c0_10] : memref<1x256xf32, #tpu.memory_space<vmem>>, vector<1x256xf32>
    %13 = vector.broadcast %12 : vector<1x256xf32> to vector<128x256xf32>
    %14 = arith.addf %11, %13 : vector<128x256xf32>
    %cst_11 = arith.constant 5.000000e-01 : f32
    %15 = vector.broadcast %cst_11 : f32 to vector<128x256xf32>
    %16 = arith.mulf %15, %14 : vector<128x256xf32>
    %17 = math.tanh %16 : vector<128x256xf32>
    %cst_12 = arith.constant 5.000000e-01 : f32
    %18 = vector.broadcast %cst_12 : f32 to vector<128x256xf32>
    %19 = arith.mulf %18, %17 : vector<128x256xf32>
    %cst_13 = arith.constant 5.000000e-01 : f32
    %20 = vector.broadcast %cst_13 : f32 to vector<128x256xf32>
    %21 = arith.addf %19, %20 : vector<128x256xf32>
    %22 = arith.truncf %21 : vector<128x256xf32> to vector<128x256xbf16>
    %c0_14 = arith.constant 0 : index
    %c0_15 = arith.constant 0 : index
    %23 = vector.load %arg6[%c0_14, %c0_15] : memref<128x256xbf16, #tpu.memory_space<vmem>>, vector<128x256xbf16>
    tpu.vector_store %arg6[%c0_14, %c0_15], %22 {strides = array<i32>} : memref<128x256xbf16, #tpu.memory_space<vmem>>, vector<128x256xbf16>,
    return
  }
  func.func @transform_0(%arg0: i32) -> (i32, i32) {
    %c0_i32 = arith.constant 0 : i32
    %c0_i32_0 = arith.constant 0 : i32
    return %arg0, %c0_i32 : i32, i32
  }
  func.func @transform_1(%arg0: i32) -> (i32, i32) {
    %c0_i32 = arith.constant 0 : i32
    %c0_i32_0 = arith.constant 0 : i32
    %c0_i32_1 = arith.constant 0 : i32
    return %c0_i32, %c0_i32_0 : i32, i32
  }
  func.func @transform_2(%arg0: i32) -> (i32, i32) {
    %c0_i32 = arith.constant 0 : i32
    %c0_i32_0 = arith.constant 0 : i32
    %c0_i32_1 = arith.constant 0 : i32
    return %c0_i32, %c0_i32_0 : i32, i32
  }
  func.func @transform_3(%arg0: i32) -> (i32, i32) {
    %c0_i32 = arith.constant 0 : i32
    %c0_i32_0 = arith.constant 0 : i32
    %c0_i32_1 = arith.constant 0 : i32
    return %c0_i32, %c0_i32_0 : i32, i32
  }
  func.func @transform_4(%arg0: i32) -> (i32, i32) {
    %c0_i32 = arith.constant 0 : i32
    %c0_i32_0 = arith.constant 0 : i32
    %c0_i32_1 = arith.constant 0 : i32
    return %c0_i32, %c0_i32_0 : i32, i32
  }
  func.func @transform_5(%arg0: i32) -> (i32, i32) {
    %c0_i32 = arith.constant 0 : i32
    %c0_i32_0 = arith.constant 0 : i32
    return %arg0, %c0_i32 : i32, i32
  }
}

</mosaic_0001>

<llo_original>
// kernel: tpu_custom_call.1
$region0: #{tpu_custom_call.1}
  #allocation0 [shape = 'u32[]', space=smem, size = 0x4, offset = 0x4, fixed_abs, tag = 'smem constant byte address 0x4 - core index']
  #allocation1 [shape = 'u32[144,128]{1,0:T(1,128)}', space=vmem, size = 0x12000, scoped, tag = 'internal scratch']
  %s0 = inlined_call_operand.hbm [shape: f32[200,256], index: 0, kind: input, shape index: {}]
  %s1 = inlined_call_operand.hbm [shape: bf16[256,512], index: 1, kind: input, shape index: {}]
  %s2 = inlined_call_operand.vmem [shape: f32[1,512], index: 2, kind: input, shape index: {}]
  %s3 = inlined_call_operand.hbm [shape: bf16[512,256], index: 3, kind: input, shape index: {}]
  %s4 = inlined_call_operand.vmem [shape: f32[1,256], index: 4, kind: input, shape index: {}]
  %s5 = inlined_call_operand.hbm [shape: bf16[200,256], index: 5, kind: output, shape index: {}]
  %s6 = sld [smem:[#allocation0]]
  $region65: #{tpu_custom_call.1} parent=0
    _
  %s8 = ssub.s32 1, %s6
  %s9 = scalar_select 0, %s8, %s6
  $region1: #{tpu_custom_call.1} parent=0
    #allocation2 [shape = 'u8[262144]{0}', space=vmem, size = 0x40000, scoped, tag = 'input window, operand 0']
    #allocation3 [shape = 's32[2]{0}', space=sflag, size = 0x8, scoped, tag = 'scoped memory for tpu_custom_call.1']
    #allocation4 [shape = 's32[2]{0}', space=sflag, size = 0x8, scoped, tag = 'scoped memory for tpu_custom_call.1']
    #allocation5 [shape = 'u8[262144]{0}', space=vmem, size = 0x40000, scoped, tag = 'input window, operand 1, single buffered']
    #allocation6 [shape = 's32[1]{0}', space=sflag, size = 0x4, scoped, tag = 'scoped memory for tpu_custom_call.1']
    #allocation7 [shape = 'u8[262144]{0}', space=vmem, size = 0x40000, scoped, tag = 'input window, operand 3, single buffered']
    #allocation8 [shape = 'u8[131072]{0}', space=vmem, size = 0x20000, scoped, tag = 'output window, operand 0']
    %10 = vsyncpa [#allocation3], 0
    %s11 = scalar_lea.sflag [#allocation3], 1
    %12 = vsyncpa %s11, 0
    %13 = vsyncpa [#allocation6], 0
    %14 = vsyncpa [#allocation4], 0
    %s15 = scalar_lea.sflag [#allocation4], 1
    %16 = vsyncpa %s15, 0
    loop: start=0, step=1, limit=4
    $region2: #{tpu_custom_call.1} parent=1 // loop_pre_header
      _
    $region3: #{tpu_custom_call.1} parent=1 // loop_header
      %s18 = sphi 0, %s22
      %p19 = scmp.ge.s32.totalorder %s18, 4
      %s28 = sphi 0, %s30
      %s31 = sphi 0, %s28
      %s32 = sphi 0, %s31
      %s48 = sphi 0, %s32
      %s52 = sphi 0, %s52
      %s54 = sphi 0, %s52
      %s55 = sphi 0, %s54
      %s69 = sphi 0, %s55
      %s73 = sphi 0, %s73
      %s75 = sphi 0, %s73
      %s76 = sphi 0, %s75
      %s90 = sphi 0, %s76
      %s94 = sphi 0, %s94
      %s96 = sphi 0, %s94
      %s97 = sphi 0, %s96
      %s111 = sphi 0, %s97
      %s115 = sphi 0, %s115
      %s117 = sphi 0, %s115
      %s118 = sphi 0, %s117
      %s132 = sphi 0, %s118
      %s138 = sphi 0, %s140
      %s141 = sphi 0, %s138
      %s142 = sphi 0, %s141
      %s158 = sphi 0, %s142
    $region4: #{tpu_custom_call.1} parent=1 // loop_header_branch
      %21 = sbr.rel (%p19) target = $region8
    $region5: #{tpu_custom_call.1} parent=1 // loop_body
      %s23 = ssub.s32 %s18, 1
      %s24 = ssub.s32 %s18, 2
      %s25 = sadd.s32 %s18, 1
      %s26 = ssub.s32 %s18, %s25
      %p27 = scmp.eq.s32.totalorder %s26, 0
      %s29 = sadd.s32 %s28, 1
      %s30 = scalar_select %p27, %s28, %s29
      %p33 = pneg %p27
      %p34 = scmp.eq.s32.totalorder %s18, 1
      %p35 = por %p33, %p34
      %p36 = scmp.ne.s32.totalorder %s28, %s31
      %p37 = scmp.eq.s32.totalorder %s18, 0
      %p38 = por %p36, %p37
      %p39 = scmp.ne.s32.totalorder %s28, %s31
      %p40 = scmp.eq.s32.totalorder %s23, 1
      %p41 = por %p39, %p40
      %p42 = scmp.ne.s32.totalorder %s31, %s32
      %p43 = scmp.eq.s32.totalorder %s23, 0
      %p44 = por %p42, %p43
      %p45 = scmp.ne.s32.totalorder %s31, %s32
      %p46 = scmp.eq.s32.totalorder %s24, 1
      %p47 = por %p45, %p46
      %p49 = scmp.ne.s32.totalorder %s32, %s48
      %p50 = scmp.eq.s32.totalorder %s24, 0
      %p51 = por %p49, %p50
      %s53 = sadd.s32 %s52, 1
      %p56 = scmp.eq.s32.totalorder %s18, 1
      %p57 = scmp.ne.s32.totalorder %s52, %s54
      %p58 = scmp.eq.s32.totalorder %s18, 0
      %p59 = por %p57, %p58
      %p60 = scmp.ne.s32.totalorder %s52, %s54
      %p61 = scmp.eq.s32.totalorder %s23, 1
      %p62 = por %p60, %p61
      %p63 = scmp.ne.s32.totalorder %s54, %s55
      %p64 = scmp.eq.s32.totalorder %s23, 0
      %p65 = por %p63, %p64
      %p66 = scmp.ne.s32.totalorder %s54, %s55
      %p67 = scmp.eq.s32.totalorder %s24, 1
      %p68 = por %p66, %p67
      %p70 = scmp.ne.s32.totalorder %s55, %s69
      %p71 = scmp.eq.s32.totalorder %s24, 0
      %p72 = por %p70, %p71
      %s74 = sadd.s32 %s73, 1
      %p77 = scmp.eq.s32.totalorder %s18, 1
      %p78 = scmp.ne.s32.totalorder %s73, %s75
      %p79 = scmp.eq.s32.totalorder %s18, 0
      %p80 = por %p78, %p79
      %p81 = scmp.ne.s32.totalorder %s73, %s75
      %p82 = scmp.eq.s32.totalorder %s23, 1
      %p83 = por %p81, %p82
      %p84 = scmp.ne.s32.totalorder %s75, %s76
      %p85 = scmp.eq.s32.totalorder %s23, 0
      %p86 = por %p84, %p85
      %p87 = scmp.ne.s32.totalorder %s75, %s76
      %p88 = scmp.eq.s32.totalorder %s24, 1
      %p89 = por %p87, %p88
      %p91 = scmp.ne.s32.totalorder %s76, %s90
      %p92 = scmp.eq.s32.totalorder %s24, 0
      %p93 = por %p91, %p92
      %s95 = sadd.s32 %s94, 1
      %p98 = scmp.eq.s32.totalorder %s18, 1
      %p99 = scmp.ne.s32.totalorder %s94, %s96
      %p100 = scmp.eq.s32.totalorder %s18, 0
      %p101 = por %p99, %p100
      %p102 = scmp.ne.s32.totalorder %s94, %s96
      %p103 = scmp.eq.s32.totalorder %s23, 1
      %p104 = por %p102, %p103
      %p105 = scmp.ne.s32.totalorder %s96, %s97
      %p106 = scmp.eq.s32.totalorder %s23, 0
      %p107 = por %p105, %p106
      %p108 = scmp.ne.s32.totalorder %s96, %s97
      %p109 = scmp.eq.s32.totalorder %s24, 1
      %p110 = por %p108, %p109
      %p112 = scmp.ne.s32.totalorder %s97, %s111
      %p113 = scmp.eq.s32.totalorder %s24, 0
      %p114 = por %p112, %p113
      %s116 = sadd.s32 %s115, 1
      %p119 = scmp.eq.s32.totalorder %s18, 1
      %p120 = scmp.ne.s32.totalorder %s115, %s117
      %p121 = scmp.eq.s32.totalorder %s18, 0
      %p122 = por %p120, %p121
      %p123 = scmp.ne.s32.totalorder %s115, %s117
      %p124 = scmp.eq.s32.totalorder %s23, 1
      %p125 = por %p123, %p124
      %p126 = scmp.ne.s32.totalorder %s117, %s118
      %p127 = scmp.eq.s32.totalorder %s23, 0
      %p128 = por %p126, %p127
      %p129 = scmp.ne.s32.totalorder %s117, %s118
      %p130 = scmp.eq.s32.totalorder %s24, 1
      %p131 = por %p129, %p130
      %p133 = scmp.ne.s32.totalorder %s118, %s132
      %p134 = scmp.eq.s32.totalorder %s24, 0
      %p135 = por %p133, %p134
      %s136 = ssub.s32 %s18, %s25
      %p137 = scmp.eq.s32.totalorder %s136, 0
      %s139 = sadd.s32 %s138, 1
      %s140 = scalar_select %p137, %s138, %s139
      %p143 = pneg %p137
      %p144 = scmp.eq.s32.totalorder %s18, 1
      %p145 = por %p143, %p144
      %p146 = scmp.ne.s32.totalorder %s138, %s141
      %p147 = scmp.eq.s32.totalorder %s18, 0
      %p148 = por %p146, %p147
      %p149 = scmp.ne.s32.totalorder %s138, %s141
      %p150 = scmp.eq.s32.totalorder %s23, 1
      %p151 = por %p149, %p150
      %p152 = scmp.ne.s32.totalorder %s141, %s142
      %p153 = scmp.eq.s32.totalorder %s23, 0
      %p154 = por %p152, %p153
      %p155 = scmp.ne.s32.totalorder %s141, %s142
      %p156 = scmp.eq.s32.totalorder %s24, 1
      %p157 = por %p155, %p156
      %p159 = scmp.ne.s32.totalorder %s142, %s158
      %p160 = scmp.eq.s32.totalorder %s24, 0
      %p161 = por %p159, %p160
      %p162 = scmp.le.s32.totalorder 1, %s18
      %p163 = scmp.lt.s32.totalorder %s18, 3
      %p164 = pnand %p162, %p163
      %p165 = pneg %p164
      // Predicated region
      $region9: #{tpu_custom_call.1} parent=5 // pred_check
        _
      $region10: #{tpu_custom_call.1} parent=5 // pred_check_branch
        %167 = sbr.rel (%p164) target = $region12
      $region11: #{tpu_custom_call.1} parent=5 // pred_region
        %s168 = ssub.s32 %s18, 1
        // Predicated region
        $region13: #{tpu_custom_call.1} parent=11 // pred_check
          %p169 = pneg %p65
        $region14: #{tpu_custom_call.1} parent=11 // pred_check_branch
          %171 = sbr.rel (%p169) target = $region16
        $region15: #{tpu_custom_call.1} parent=11 // pred_region
          %s173 = ssub.s32 8192, 8192
          %174 = vsyncadd [#allocation6], %s173
          %s175 = sshll.u32 [#allocation5], 4
          %s176 = int_to_ptr.vmem [resolvable:$true] %s175
          %181 = dma.hbm_to_vmem [thread:$0]  %s1, 8192, %s176, [#allocation6], 256, 256, 16
        $region16: #{tpu_custom_call.1} parent=11 // pred_fallthru
          _
        // Predicated region
        $region17: #{tpu_custom_call.1} parent=11 // pred_check
          %p182 = pneg %p86
        $region18: #{tpu_custom_call.1} parent=11 // pred_check_branch
          %184 = sbr.rel (%p182) target = $region20
        $region19: #{tpu_custom_call.1} parent=11 // pred_region
          _
        $region20: #{tpu_custom_call.1} parent=11 // pred_fallthru
          _
        // Predicated region
        $region21: #{tpu_custom_call.1} parent=11 // pred_check
          %p185 = pneg %p107
        $region22: #{tpu_custom_call.1} parent=11 // pred_check_branch
          %187 = sbr.rel (%p185) target = $region24
        $region23: #{tpu_custom_call.1} parent=11 // pred_region
          %s189 = ssub.s32 8192, 8192
          %190 = vsyncadd [#allocation6], %s189
          %s191 = sshll.u32 [#allocation7], 4
          %s192 = int_to_ptr.vmem [resolvable:$true] %s191
          %197 = dma.hbm_to_vmem [thread:$0]  %s3, 8192, %s192, [#allocation6], 128, 128, 8
        $region24: #{tpu_custom_call.1} parent=11 // pred_fallthru
          _
        // Predicated region
        $region25: #{tpu_custom_call.1} parent=11 // pred_check
          %p198 = pneg %p128
        $region26: #{tpu_custom_call.1} parent=11 // pred_check_branch
          %200 = sbr.rel (%p198) target = $region28
        $region27: #{tpu_custom_call.1} parent=11 // pred_region
          _
        $region28: #{tpu_custom_call.1} parent=11 // pred_fallthru
          _
      $region12: #{tpu_custom_call.1} parent=5 // pred_fallthru
        _
      %p201 = scmp.lt.s32.totalorder %s18, 2
      // Predicated region
      $region29: #{tpu_custom_call.1} parent=5 // pred_check
        %p202 = pneg %p201
      $region30: #{tpu_custom_call.1} parent=5 // pred_check_branch
        %204 = sbr.rel (%p202) target = $region32
      $region31: #{tpu_custom_call.1} parent=5 // pred_region
        // Predicated region
        $region33: #{tpu_custom_call.1} parent=31 // pred_check
          %p205 = pneg %p38
        $region34: #{tpu_custom_call.1} parent=31 // pred_check_branch
          %207 = sbr.rel (%p205) target = $region36
        $region35: #{tpu_custom_call.1} parent=31 // pred_region
          %s208 = sand.u32 %s28, 1
          %s209 = scalar_lea.sflag [#allocation3], %s208
          %s210 = sand.u32 %s28, 1
          %s211 = smul.addr %s210, 256
          %s212 = scalar_lea.vmem [#allocation2], %s211
          %s213 = smul.u32 16, %s18
          %s214 = ssub.s32 25, %s213
          %p215 = scmp.lt.s32.totalorder %s214, 16
          %s216 = scalar_select %p215, %s214, 16
          %s217 = smul.u32 128, %s216
          %s218 = smul.u32 %s217, 2
          %s220 = ssub.s32 4096, %s218
          %221 = vsyncadd %s209, %s220
          %p222 = scmp.ne.s32.totalorder 0, %s218
          %s223 = smul.addr %s213, 2
          %s224 = smul.addr %s223, 128
          %s225 = scalar_lea.hbm %s0, %s224
          %s226 = smul.u32 16, %s216
          %s227 = sshll.u32 %s212, 4
          %s228 = int_to_ptr.vmem [resolvable:$true] %s227
          %s229 = sshll.u32 %s226, 4
          %233 = dma.hbm_to_vmem [thread:$0]  (%p222), %s225, %s229, %s228, %s209, 256, 256, 16
        $region36: #{tpu_custom_call.1} parent=31 // pred_fallthru
          _
      $region32: #{tpu_custom_call.1} parent=5 // pred_fallthru
        _
      %p234 = scmp.le.s32.totalorder 1, %s18
      %p235 = scmp.lt.s32.totalorder %s18, 3
      %p236 = pnand %p234, %p235
      %p237 = pneg %p236
      // Predicated region
      $region37: #{tpu_custom_call.1} parent=5 // pred_check
        _
      $region38: #{tpu_custom_call.1} parent=5 // pred_check_branch
        %239 = sbr.rel (%p236) target = $region40
      $region39: #{tpu_custom_call.1} parent=5 // pred_region
        %s240 = ssub.s32 %s18, 1
        %s241 = sand.u32 %s31, 1
        %s242 = scalar_lea.sflag [#allocation3], %s241
        %s243 = sand.u32 %s31, 1
        %s244 = smul.addr %s243, 256
        %s245 = scalar_lea.vmem [#allocation2], %s244
        // Predicated region
        $region41: #{tpu_custom_call.1} parent=39 // pred_check
          %p246 = pneg %p44
        $region42: #{tpu_custom_call.1} parent=39 // pred_check_branch
          %248 = sbr.rel (%p246) target = $region44
        $region43: #{tpu_custom_call.1} parent=39 // pred_region
          %249 = dma.done %s242, 4096
        $region44: #{tpu_custom_call.1} parent=39 // pred_fallthru
          _
        // Predicated region
        $region45: #{tpu_custom_call.1} parent=39 // pred_check
          %p250 = pneg %p65
        $region46: #{tpu_custom_call.1} parent=39 // pred_check_branch
          %252 = sbr.rel (%p250) target = $region48
        $region47: #{tpu_custom_call.1} parent=39 // pred_region
          %253 = dma.done [#allocation6], 8192
        $region48: #{tpu_custom_call.1} parent=39 // pred_fallthru
          _
        // Predicated region
        $region49: #{tpu_custom_call.1} parent=39 // pred_check
          %p254 = pneg %p107
        $region50: #{tpu_custom_call.1} parent=39 // pred_check_branch
          %256 = sbr.rel (%p254) target = $region52
        $region51: #{tpu_custom_call.1} parent=39 // pred_region
          %257 = dma.done [#allocation6], 8192
        $region52: #{tpu_custom_call.1} parent=39 // pred_fallthru
          _
        %s258 = sand.u32 %s31, 1
        %s259 = scalar_lea.sflag [#allocation3], %s258
        %s260 = sand.u32 %s31, 1
        %s261 = smul.addr %s260, 256
        %s262 = scalar_lea.vmem [#allocation2], %s261
        %p263 = pneg %p44
        %p264 = pneg %p41
        %p265 = pneg %p65
        %p266 = pneg %p62
        %p267 = pneg %p86
        %p268 = pneg %p83
        %p269 = pneg %p107
        %p270 = pneg %p104
        %p271 = pneg %p128
        %p272 = pneg %p125
        %p273 = pneg %p154
        %p274 = pneg %p151
        %s275 = sand.u32 %s141, 1
        %s276 = scalar_lea.sflag [#allocation4], %s275
        %s277 = sand.u32 %s141, 1
        %s278 = smul.addr %s277, 128
        %s279 = scalar_lea.vmem [#allocation8], %s278
        %s280 = smul.u32 16, %s23
        %s281 = ssub.s32 25, %s280
        %p282 = scmp.lt.s32.totalorder %s281, 16
        %s283 = scalar_select %p282, %s281, 16
        %s284 = smul.u32 128, %s283
        %s285 = smul.u32 %s284, 2
        %s286 = smul.u32 16, %s23
        %s287 = ssub.s32 25, %s286
        %p288 = scmp.lt.s32.totalorder %s287, 16
        %s289 = scalar_select %p288, %s287, 16
        %s290 = smul.u32 64, %s289
        %s291 = smul.u32 %s290, 2
        %v292 = vld [vmem:[%s245] sm:$0xff]
        %v293 = vld [vmem:[%s245 + $0x8] sm:$0xff]
        %v294 = vld [vmem:[%s245 + $0x10] sm:$0xff]
        %v295 = vld [vmem:[%s245 + $0x18] sm:$0xff]
        %v296 = vld [vmem:[%s245 + $0x20] sm:$0xff]
        %v297 = vld [vmem:[%s245 + $0x28] sm:$0xff]
        %v298 = vld [vmem:[%s245 + $0x30] sm:$0xff]
        %v299 = vld [vmem:[%s245 + $0x38] sm:$0xff]
        %v300 = vld [vmem:[%s245 + $0x40] sm:$0xff]
        %v301 = vld [vmem:[%s245 + $0x48] sm:$0xff]
        %v302 = vld [vmem:[%s245 + $0x50] sm:$0xff]
        %v303 = vld [vmem:[%s245 + $0x58] sm:$0xff]
        %v304 = vld [vmem:[%s245 + $0x60] sm:$0xff]
        %v305 = vld [vmem:[%s245 + $0x68] sm:$0xff]
        %v306 = vld [vmem:[%s245 + $0x70] sm:$0xff]
        %v307 = vld [vmem:[%s245 + $0x78] sm:$0xff]
        %v308 = vld [vmem:[%s245 + $0x80] sm:$0xff]
        %v309 = vld [vmem:[%s245 + $0x88] sm:$0xff]
        %v310 = vld [vmem:[%s245 + $0x90] sm:$0xff]
        %v311 = vld [vmem:[%s245 + $0x98] sm:$0xff]
        %v312 = vld [vmem:[%s245 + $0xa0] sm:$0xff]
        %v313 = vld [vmem:[%s245 + $0xa8] sm:$0xff]
        %v314 = vld [vmem:[%s245 + $0xb0] sm:$0xff]
        %v315 = vld [vmem:[%s245 + $0xb8] sm:$0xff]
        %v316 = vld [vmem:[%s245 + $0xc0] sm:$0xff]
        %v317 = vld [vmem:[%s245 + $0xc8] sm:$0xff]
        %v318 = vld [vmem:[%s245 + $0xd0] sm:$0xff]
        %v319 = vld [vmem:[%s245 + $0xd8] sm:$0xff]
        %v320 = vld [vmem:[%s245 + $0xe0] sm:$0xff]
        %v321 = vld [vmem:[%s245 + $0xe8] sm:$0xff]
        %v322 = vld [vmem:[%s245 + $0xf0] sm:$0xff]
        %v323 = vld [vmem:[%s245 + $0xf8] sm:$0xff]
        %v324 = vpack.c.bf16 %v294, %v292
        %v325 = vpack.c.bf16 %v295, %v293
        %v326 = vpack.c.bf16 %v298, %v296
        %v327 = vpack.c.bf16 %v299, %v297
        %v328 = vpack.c.bf16 %v302, %v300
        %v329 = vpack.c.bf16 %v303, %v301
        %v330 = vpack.c.bf16 %v306, %v304
        %v331 = vpack.c.bf16 %v307, %v305
        %v332 = vpack.c.bf16 %v310, %v308
        %v333 = vpack.c.bf16 %v311, %v309
        %v334 = vpack.c.bf16 %v314, %v312
        %v335 = vpack.c.bf16 %v315, %v313
        %v336 = vpack.c.bf16 %v318, %v316
        %v337 = vpack.c.bf16 %v319, %v317
        %v338 = vpack.c.bf16 %v322, %v320
        %v339 = vpack.c.bf16 %v323, %v321
        %v340 = vld [vmem:[#allocation5] sm:$0xff]
        %v341 = vld [vmem:[#allocation5 + $0x8] sm:$0xff]
        %v342 = vld [vmem:[#allocation5 + $0x10] sm:$0xff]
        %v343 = vld [vmem:[#allocation5 + $0x18] sm:$0xff]
        %v344 = vld [vmem:[#allocation5 + $0x20] sm:$0xff]
        %v345 = vld [vmem:[#allocation5 + $0x28] sm:$0xff]
        %v346 = vld [vmem:[#allocation5 + $0x30] sm:$0xff]
        %v347 = vld [vmem:[#allocation5 + $0x38] sm:$0xff]
        %v348 = vld [vmem:[#allocation5 + $0x40] sm:$0xff]
        %v349 = vld [vmem:[#allocation5 + $0x48] sm:$0xff]
        %v350 = vld [vmem:[#allocation5 + $0x50] sm:$0xff]
        %v351 = vld [vmem:[#allocation5 + $0x58] sm:$0xff]
        %v352 = vld [vmem:[#allocation5 + $0x60] sm:$0xff]
        %v353 = vld [vmem:[#allocation5 + $0x68] sm:$0xff]
        %v354 = vld [vmem:[#allocation5 + $0x70] sm:$0xff]
        %v355 = vld [vmem:[#allocation5 + $0x78] sm:$0xff]
        %v356 = vld [vmem:[#allocation5 + $0x80] sm:$0xff]
        %v357 = vld [vmem:[#allocation5 + $0x88] sm:$0xff]
        %v358 = vld [vmem:[#allocation5 + $0x90] sm:$0xff]
        %v359 = vld [vmem:[#allocation5 + $0x98] sm:$0xff]
        %v360 = vld [vmem:[#allocation5 + $0xa0] sm:$0xff]
        %v361 = vld [vmem:[#allocation5 + $0xa8] sm:$0xff]
        %v362 = vld [vmem:[#allocation5 + $0xb0] sm:$0xff]
        %v363 = vld [vmem:[#allocation5 + $0xb8] sm:$0xff]
        %v364 = vld [vmem:[#allocation5 + $0xc0] sm:$0xff]
        %v365 = vld [vmem:[#allocation5 + $0xc8] sm:$0xff]
        %v366 = vld [vmem:[#allocation5 + $0xd0] sm:$0xff]
        %v367 = vld [vmem:[#allocation5 + $0xd8] sm:$0xff]
        %v368 = vld [vmem:[#allocation5 + $0xe0] sm:$0xff]
        %v369 = vld [vmem:[#allocation5 + $0xe8] sm:$0xff]
        %v370 = vld [vmem:[#allocation5 + $0xf0] sm:$0xff]
        %v371 = vld [vmem:[#allocation5 + $0xf8] sm:$0xff]
        %v372 = vld [vmem:[#allocation5 + $0x100] sm:$0xff]
        %v373 = vld [vmem:[#allocation5 + $0x108] sm:$0xff]
        %v374 = vld [vmem:[#allocation5 + $0x110] sm:$0xff]
        %v375 = vld [vmem:[#allocation5 + $0x118] sm:$0xff]
        %v376 = vld [vmem:[#allocation5 + $0x120] sm:$0xff]
        %v377 = vld [vmem:[#allocation5 + $0x128] sm:$0xff]
        %v378 = vld [vmem:[#allocation5 + $0x130] sm:$0xff]
        %v379 = vld [vmem:[#allocation5 + $0x138] sm:$0xff]
        %v380 = vld [vmem:[#allocation5 + $0x140] sm:$0xff]
        %v381 = vld [vmem:[#allocation5 + $0x148] sm:$0xff]
        %v382 = vld [vmem:[#allocation5 + $0x150] sm:$0xff]
        %v383 = vld [vmem:[#allocation5 + $0x158] sm:$0xff]
        %v384 = vld [vmem:[#allocation5 + $0x160] sm:$0xff]
        %v385 = vld [vmem:[#allocation5 + $0x168] sm:$0xff]
        %v386 = vld [vmem:[#allocation5 + $0x170] sm:$0xff]
        %v387 = vld [vmem:[#allocation5 + $0x178] sm:$0xff]
        %v388 = vld [vmem:[#allocation5 + $0x180] sm:$0xff]
        %v389 = vld [vmem:[#allocation5 + $0x188] sm:$0xff]
        %v390 = vld [vmem:[#allocation5 + $0x190] sm:$0xff]
        %v391 = vld [vmem:[#allocation5 + $0x198] sm:$0xff]
        %v392 = vld [vmem:[#allocation5 + $0x1a0] sm:$0xff]
        %v393 = vld [vmem:[#allocation5 + $0x1a8] sm:$0xff]
        %v394 = vld [vmem:[#allocation5 + $0x1b0] sm:$0xff]
        %v395 = vld [vmem:[#allocation5 + $0x1b8] sm:$0xff]
        %v396 = vld [vmem:[#allocation5 + $0x1c0] sm:$0xff]
        %v397 = vld [vmem:[#allocation5 + $0x1c8] sm:$0xff]
        %v398 = vld [vmem:[#allocation5 + $0x1d0] sm:$0xff]
        %v399 = vld [vmem:[#allocation5 + $0x1d8] sm:$0xff]
        %v400 = vld [vmem:[#allocation5 + $0x1e0] sm:$0xff]
        %v401 = vld [vmem:[#allocation5 + $0x1e8] sm:$0xff]
        %v402 = vld [vmem:[#allocation5 + $0x1f0] sm:$0xff]
        %v403 = vld [vmem:[#allocation5 + $0x1f8] sm:$0xff]
        %v404 = vld [vmem:[%s2] sm:$0xf]
        %v406 = vlaneseq
        %v407 = vshrl.u32 %v406, 7
        %v408 = vsub.s32 0, %v407
        %v409 = vrot.slane %v404, %v408
        %v410 = vlaneseq
        %v411 = vshrl.u32 %v410, 7
        %v412 = vsub.s32 1, %v411
        %v413 = vrot.slane %v404, %v412
        %v414 = vlaneseq
        %v415 = vshrl.u32 %v414, 7
        %v416 = vsub.s32 2, %v415
        %v417 = vrot.slane %v404, %v416
        %v418 = vlaneseq
        %v419 = vshrl.u32 %v418, 7
        %v420 = vsub.s32 3, %v419
        %v421 = vrot.slane %v404, %v420
        %v490 = vunpack.c.l.b16 %v340
        %v491 = vunpack.c.h.b16 %v340
        %v492 = vunpack.c.l.b16 %v341
        %v493 = vunpack.c.h.b16 %v341
        %v494 = vunpack.c.l.b16 %v342
        %v495 = vunpack.c.h.b16 %v342
        %v496 = vunpack.c.l.b16 %v343
        %v497 = vunpack.c.h.b16 %v343
        %v498 = vunpack.c.l.b16 %v344
        %v499 = vunpack.c.h.b16 %v344
        %v500 = vunpack.c.l.b16 %v345
        %v501 = vunpack.c.h.b16 %v345
        %v502 = vunpack.c.l.b16 %v346
        %v503 = vunpack.c.h.b16 %v346
        %v504 = vunpack.c.l.b16 %v347
        %v505 = vunpack.c.h.b16 %v347
        %v506 = vunpack.c.l.b16 %v348
        %v507 = vunpack.c.h.b16 %v348
        %v508 = vunpack.c.l.b16 %v349
        %v509 = vunpack.c.h.b16 %v349
        %v510 = vunpack.c.l.b16 %v350
        %v511 = vunpack.c.h.b16 %v350
        %v512 = vunpack.c.l.b16 %v351
        %v513 = vunpack.c.h.b16 %v351
        %v514 = vunpack.c.l.b16 %v352
        %v515 = vunpack.c.h.b16 %v352
        %v516 = vunpack.c.l.b16 %v353
        %v517 = vunpack.c.h.b16 %v353
        %v518 = vunpack.c.l.b16 %v354
        %v519 = vunpack.c.h.b16 %v354
        %v520 = vunpack.c.l.b16 %v355
        %v521 = vunpack.c.h.b16 %v355
        %v522 = vunpack.c.l.b16 %v356
        %v523 = vunpack.c.h.b16 %v356
        %v524 = vunpack.c.l.b16 %v357
        %v525 = vunpack.c.h.b16 %v357
        %v526 = vunpack.c.l.b16 %v358
        %v527 = vunpack.c.h.b16 %v358
        %v528 = vunpack.c.l.b16 %v359
        %v529 = vunpack.c.h.b16 %v359
        %v530 = vunpack.c.l.b16 %v360
        %v531 = vunpack.c.h.b16 %v360
        %v532 = vunpack.c.l.b16 %v361
        %v533 = vunpack.c.h.b16 %v361
        %v534 = vunpack.c.l.b16 %v362
        %v535 = vunpack.c.h.b16 %v362
        %v536 = vunpack.c.l.b16 %v363
        %v537 = vunpack.c.h.b16 %v363
        %v538 = vunpack.c.l.b16 %v364
        %v539 = vunpack.c.h.b16 %v364
        %v540 = vunpack.c.l.b16 %v365
        %v541 = vunpack.c.h.b16 %v365
        %v542 = vunpack.c.l.b16 %v366
        %v543 = vunpack.c.h.b16 %v366
        %v544 = vunpack.c.l.b16 %v367
        %v545 = vunpack.c.h.b16 %v367
        %v546 = vunpack.c.l.b16 %v368
        %v547 = vunpack.c.h.b16 %v368
        %v548 = vunpack.c.l.b16 %v369
        %v549 = vunpack.c.h.b16 %v369
        %v550 = vunpack.c.l.b16 %v370
        %v551 = vunpack.c.h.b16 %v370
        %v552 = vunpack.c.l.b16 %v371
        %v553 = vunpack.c.h.b16 %v371
        %v554 = vunpack.c.l.b16 %v372
        %v555 = vunpack.c.h.b16 %v372
        %v556 = vunpack.c.l.b16 %v373
        %v557 = vunpack.c.h.b16 %v373
        %v558 = vunpack.c.l.b16 %v374
        %v559 = vunpack.c.h.b16 %v374
        %v560 = vunpack.c.l.b16 %v375
        %v561 = vunpack.c.h.b16 %v375
        %v562 = vunpack.c.l.b16 %v376
        %v563 = vunpack.c.h.b16 %v376
        %v564 = vunpack.c.l.b16 %v377
        %v565 = vunpack.c.h.b16 %v377
        %v566 = vunpack.c.l.b16 %v378
        %v567 = vunpack.c.h.b16 %v378
        %v568 = vunpack.c.l.b16 %v379
        %v569 = vunpack.c.h.b16 %v379
        %v570 = vunpack.c.l.b16 %v380
        %v571 = vunpack.c.h.b16 %v380
        %v572 = vunpack.c.l.b16 %v381
        %v573 = vunpack.c.h.b16 %v381
        %v574 = vunpack.c.l.b16 %v382
        %v575 = vunpack.c.h.b16 %v382
        %v576 = vunpack.c.l.b16 %v383
        %v577 = vunpack.c.h.b16 %v383
        %v578 = vunpack.c.l.b16 %v384
        %v579 = vunpack.c.h.b16 %v384
        %v580 = vunpack.c.l.b16 %v385
        %v581 = vunpack.c.h.b16 %v385
        %v582 = vunpack.c.l.b16 %v386
        %v583 = vunpack.c.h.b16 %v386
        %v584 = vunpack.c.l.b16 %v387
        %v585 = vunpack.c.h.b16 %v387
        %v586 = vunpack.c.l.b16 %v388
        %v587 = vunpack.c.h.b16 %v388
        %v588 = vunpack.c.l.b16 %v389
        %v589 = vunpack.c.h.b16 %v389
        %v590 = vunpack.c.l.b16 %v390
        %v591 = vunpack.c.h.b16 %v390
        %v592 = vunpack.c.l.b16 %v391
        %v593 = vunpack.c.h.b16 %v391
        %v594 = vunpack.c.l.b16 %v392
        %v595 = vunpack.c.h.b16 %v392
        %v596 = vunpack.c.l.b16 %v393
        %v597 = vunpack.c.h.b16 %v393
        %v598 = vunpack.c.l.b16 %v394
        %v599 = vunpack.c.h.b16 %v394
        %v600 = vunpack.c.l.b16 %v395
        %v601 = vunpack.c.h.b16 %v395
        %v602 = vunpack.c.l.b16 %v396
        %v603 = vunpack.c.h.b16 %v396
        %v604 = vunpack.c.l.b16 %v397
        %v605 = vunpack.c.h.b16 %v397
        %v606 = vunpack.c.l.b16 %v398
        %v607 = vunpack.c.h.b16 %v398
        %v608 = vunpack.c.l.b16 %v399
        %v609 = vunpack.c.h.b16 %v399
        %v610 = vunpack.c.l.b16 %v400
        %v611 = vunpack.c.h.b16 %v400
        %v612 = vunpack.c.l.b16 %v401
        %v613 = vunpack.c.h.b16 %v401
        %v614 = vunpack.c.l.b16 %v402
        %v615 = vunpack.c.h.b16 %v402
        %v616 = vunpack.c.l.b16 %v403
        %v617 = vunpack.c.h.b16 %v403
        %v618 = vpack.c.b16 %v494, %v490
        %v619 = vpack.c.b16 %v495, %v491
        %v620 = vpack.c.b16 %v496, %v492
        %v621 = vpack.c.b16 %v497, %v493
        %v622 = vpack.c.b16 %v502, %v498
        %v623 = vpack.c.b16 %v503, %v499
        %v624 = vpack.c.b16 %v504, %v500
        %v625 = vpack.c.b16 %v505, %v501
        %v626 = vpack.c.b16 %v510, %v506
        %v627 = vpack.c.b16 %v511, %v507
        %v628 = vpack.c.b16 %v512, %v508
        %v629 = vpack.c.b16 %v513, %v509
        %v630 = vpack.c.b16 %v518, %v514
        %v631 = vpack.c.b16 %v519, %v515
        %v632 = vpack.c.b16 %v520, %v516
        %v633 = vpack.c.b16 %v521, %v517
        %v634 = vpack.c.b16 %v526, %v522
        %v635 = vpack.c.b16 %v527, %v523
        %v636 = vpack.c.b16 %v528, %v524
        %v637 = vpack.c.b16 %v529, %v525
        %v638 = vpack.c.b16 %v534, %v530
        %v639 = vpack.c.b16 %v535, %v531
        %v640 = vpack.c.b16 %v536, %v532
        %v641 = vpack.c.b16 %v537, %v533
        %v642 = vpack.c.b16 %v542, %v538
        %v643 = vpack.c.b16 %v543, %v539
        %v644 = vpack.c.b16 %v544, %v540
        %v645 = vpack.c.b16 %v545, %v541
        %v646 = vpack.c.b16 %v550, %v546
        %v647 = vpack.c.b16 %v551, %v547
        %v648 = vpack.c.b16 %v552, %v548
        %v649 = vpack.c.b16 %v553, %v549
        %v650 = vpack.c.b16 %v558, %v554
        %v651 = vpack.c.b16 %v559, %v555
        %v652 = vpack.c.b16 %v560, %v556
        %v653 = vpack.c.b16 %v561, %v557
        %v654 = vpack.c.b16 %v566, %v562
        %v655 = vpack.c.b16 %v567, %v563
        %v656 = vpack.c.b16 %v568, %v564
        %v657 = vpack.c.b16 %v569, %v565
        %v658 = vpack.c.b16 %v574, %v570
        %v659 = vpack.c.b16 %v575, %v571
        %v660 = vpack.c.b16 %v576, %v572
        %v661 = vpack.c.b16 %v577, %v573
        %v662 = vpack.c.b16 %v582, %v578
        %v663 = vpack.c.b16 %v583, %v579
        %v664 = vpack.c.b16 %v584, %v580
        %v665 = vpack.c.b16 %v585, %v581
        %v666 = vpack.c.b16 %v590, %v586
        %v667 = vpack.c.b16 %v591, %v587
        %v668 = vpack.c.b16 %v592, %v588
        %v669 = vpack.c.b16 %v593, %v589
        %v670 = vpack.c.b16 %v598, %v594
        %v671 = vpack.c.b16 %v599, %v595
        %v672 = vpack.c.b16 %v600, %v596
        %v673 = vpack.c.b16 %v601, %v597
        %v674 = vpack.c.b16 %v606, %v602
        %v675 = vpack.c.b16 %v607, %v603
        %v676 = vpack.c.b16 %v608, %v604
        %v677 = vpack.c.b16 %v609, %v605
        %v678 = vpack.c.b16 %v614, %v610
        %v679 = vpack.c.b16 %v615, %v611
        %v680 = vpack.c.b16 %v616, %v612
        %v681 = vpack.c.b16 %v617, %v613
        %746 = vmatprep.subr.bf16.mxu0 %v619
        %747 = vmatpush1.bf16.msra.mxu0 %v618
        %748 = vmatprep.subr.bf16.mxu0 %v623
        %749 = vmatpush1.bf16.msra.mxu0 %v622
        %750 = vmatprep.subr.bf16.mxu0 %v627
        %751 = vmatpush1.bf16.msra.mxu0 %v626
        %752 = vmatprep.subr.bf16.mxu0 %v631
        %753 = vmatpush1.bf16.msra.mxu0 %v630
        %754 = vmatprep.subr.bf16.mxu0 %v635
        %755 = vmatpush1.bf16.msra.mxu0 %v634
        %756 = vmatprep.subr.bf16.mxu0 %v639
        %757 = vmatpush1.bf16.msra.mxu0 %v638
        %758 = vmatprep.subr.bf16.mxu0 %v643
        %759 = vmatpush1.bf16.msra.mxu0 %v642
        %760 = vmatprep.subr.bf16.mxu0 %v647
        %761 = vmatpush1.bf16.msra.mxu0 %v646
        %762 = vmatprep.subr.bf16.mxu0 %v651
        %763 = vmatpush1.bf16.msra.mxu0 %v650
        %764 = vmatprep.subr.bf16.mxu0 %v655
        %765 = vmatpush1.bf16.msra.mxu0 %v654
        %766 = vmatprep.subr.bf16.mxu0 %v659
        %767 = vmatpush1.bf16.msra.mxu0 %v658
        %768 = vmatprep.subr.bf16.mxu0 %v663
        %769 = vmatpush1.bf16.msra.mxu0 %v662
        %770 = vmatprep.subr.bf16.mxu0 %v667
        %771 = vmatpush1.bf16.msra.mxu0 %v666
        %772 = vmatprep.subr.bf16.mxu0 %v671
        %773 = vmatpush1.bf16.msra.mxu0 %v670
        %774 = vmatprep.subr.bf16.mxu0 %v675
        %775 = vmatpush1.bf16.msra.mxu0 %v674
        %776 = vmatprep.subr.bf16.mxu0 %v679
        %777 = vmatpush1.bf16.msra.mxu0 %v678
        %778 = vmatprep.mubr.bf16.mxu0 %v325
        %779 = vmatmul.mubr.bf16.gmra.mrb[0].mxu0 %v324
        %v780 = vpop.f32.mrb[0].mxu0
        %v781 = vadd.f32 %v409, %v780
        %v782 = vpop.f32.mrb[0].mxu0
        %v783 = vadd.f32 %v413, %v782
        %v784 = vpop.f32.mrb[0].mxu0
        %v785 = vadd.f32 %v409, %v784
        %v786 = vpop.f32.mrb[0].mxu0
        %v787 = vadd.f32 %v413, %v786
        %788 = vmatprep.mubr.bf16.mxu0 %v327
        %789 = vmatmul.mubr.bf16.gmra.mrb[0].mxu0 %v326
        %v790 = vpop.f32.mrb[0].mxu0
        %v791 = vadd.f32 %v409, %v790
        %v792 = vpop.f32.mrb[0].mxu0
        %v793 = vadd.f32 %v413, %v792
        %v794 = vpop.f32.mrb[0].mxu0
        %v795 = vadd.f32 %v409, %v794
        %v796 = vpop.f32.mrb[0].mxu0
        %v797 = vadd.f32 %v413, %v796
        %798 = vmatprep.mubr.bf16.mxu0 %v329
        %799 = vmatmul.mubr.bf16.gmra.mrb[0].mxu0 %v328
        %v800 = vpop.f32.mrb[0].mxu0
        %v801 = vadd.f32 %v409, %v800
        %v802 = vpop.f32.mrb[0].mxu0
        %v803 = vadd.f32 %v413, %v802
        %v804 = vpop.f32.mrb[0].mxu0
        %v805 = vadd.f32 %v409, %v804
        %v806 = vpop.f32.mrb[0].mxu0
        %v807 = vadd.f32 %v413, %v806
        %808 = vmatprep.mubr.bf16.mxu0 %v331
        %809 = vmatmul.mubr.bf16.gmra.mrb[0].mxu0 %v330
        %v810 = vpop.f32.mrb[0].mxu0
        %v811 = vadd.f32 %v409, %v810
        %v812 = vpop.f32.mrb[0].mxu0
        %v813 = vadd.f32 %v413, %v812
        %v814 = vpop.f32.mrb[0].mxu0
        %v815 = vadd.f32 %v409, %v814
        %v816 = vpop.f32.mrb[0].mxu0
        %v817 = vadd.f32 %v413, %v816
        %818 = vmatprep.mubr.bf16.mxu0 %v333
        %819 = vmatmul.mubr.bf16.gmra.mrb[0].mxu0 %v332
        %v820 = vpop.f32.mrb[0].mxu0
        %v821 = vadd.f32 %v409, %v820
        %v822 = vpop.f32.mrb[0].mxu0
        %v823 = vadd.f32 %v413, %v822
        %v824 = vpop.f32.mrb[0].mxu0
        %v825 = vadd.f32 %v409, %v824
        %v826 = vpop.f32.mrb[0].mxu0
        %v827 = vadd.f32 %v413, %v826
        %828 = vmatprep.mubr.bf16.mxu0 %v335
        %829 = vmatmul.mubr.bf16.gmra.mrb[0].mxu0 %v334
        %v830 = vpop.f32.mrb[0].mxu0
        %v831 = vadd.f32 %v409, %v830
        %v832 = vpop.f32.mrb[0].mxu0
        %v833 = vadd.f32 %v413, %v832
        %v834 = vpop.f32.mrb[0].mxu0
        %v835 = vadd.f32 %v409, %v834
        %v836 = vpop.f32.mrb[0].mxu0
        %v837 = vadd.f32 %v413, %v836
        %838 = vmatprep.mubr.bf16.mxu0 %v337
        %839 = vmatmul.mubr.bf16.gmra.mrb[0].mxu0 %v336
        %v840 = vpop.f32.mrb[0].mxu0
        %v841 = vadd.f32 %v409, %v840
        %v842 = vpop.f32.mrb[0].mxu0
        %v843 = vadd.f32 %v413, %v842
        %v844 = vpop.f32.mrb[0].mxu0
        %v845 = vadd.f32 %v409, %v844
        %v846 = vpop.f32.mrb[0].mxu0
        %v847 = vadd.f32 %v413, %v846
        %848 = vmatprep.mubr.bf16.mxu0 %v339
        %849 = vmatmul.mubr.bf16.gmra.mrb[0].mxu0 %v338
        %v850 = vpop.f32.mrb[0].mxu0
        %v851 = vadd.f32 %v409, %v850
        %v852 = vpop.f32.mrb[0].mxu0
        %v853 = vadd.f32 %v413, %v852
        %v854 = vpop.f32.mrb[0].mxu0
        %v855 = vadd.f32 %v409, %v854
        %v856 = vpop.f32.mrb[0].mxu0
        %v857 = vadd.f32 %v413, %v856
        %858 = vdwg.mxu0
        %859 = vmatprep.subr.bf16.mxu0 %v621
        %860 = vmatpush1.bf16.msra.mxu0 %v620
        %861 = vmatprep.subr.bf16.mxu0 %v625
        %862 = vmatpush1.bf16.msra.mxu0 %v624
        %863 = vmatprep.subr.bf16.mxu0 %v629
        %864 = vmatpush1.bf16.msra.mxu0 %v628
        %865 = vmatprep.subr.bf16.mxu0 %v633
        %866 = vmatpush1.bf16.msra.mxu0 %v632
        %867 = vmatprep.subr.bf16.mxu0 %v637
        %868 = vmatpush1.bf16.msra.mxu0 %v636
        %869 = vmatprep.subr.bf16.mxu0 %v641
        %870 = vmatpush1.bf16.msra.mxu0 %v640
        %871 = vmatprep.subr.bf16.mxu0 %v645
        %872 = vmatpush1.bf16.msra.mxu0 %v644
        %873 = vmatprep.subr.bf16.mxu0 %v649
        %874 = vmatpush1.bf16.msra.mxu0 %v648
        %875 = vmatprep.subr.bf16.mxu0 %v653
        %876 = vmatpush1.bf16.msra.mxu0 %v652
        %877 = vmatprep.subr.bf16.mxu0 %v657
        %878 = vmatpush1.bf16.msra.mxu0 %v656
        %879 = vmatprep.subr.bf16.mxu0 %v661
        %880 = vmatpush1.bf16.msra.mxu0 %v660
        %881 = vmatprep.subr.bf16.mxu0 %v665
        %882 = vmatpush1.bf16.msra.mxu0 %v664
        %883 = vmatprep.subr.bf16.mxu0 %v669
        %884 = vmatpush1.bf16.msra.mxu0 %v668
        %885 = vmatprep.subr.bf16.mxu0 %v673
        %886 = vmatpush1.bf16.msra.mxu0 %v672
        %887 = vmatprep.subr.bf16.mxu0 %v677
        %888 = vmatpush1.bf16.msra.mxu0 %v676
        %889 = vmatprep.subr.bf16.mxu0 %v681
        %890 = vmatpush1.bf16.msra.mxu0 %v680
        %891 = vmatprep.mubr.bf16.mxu0 %v325
        %892 = vmatmul.mubr.bf16.gmra.mrb[0].mxu0 %v324
        %v893 = vpop.f32.mrb[0].mxu0
        %v894 = vadd.f32 %v417, %v893
        %v895 = vpop.f32.mrb[0].mxu0
        %v896 = vadd.f32 %v421, %v895
        %v897 = vpop.f32.mrb[0].mxu0
        %v898 = vadd.f32 %v417, %v897
        %v899 = vpop.f32.mrb[0].mxu0
        %v900 = vadd.f32 %v421, %v899
        %901 = vmatprep.mubr.bf16.mxu0 %v327
        %902 = vmatmul.mubr.bf16.gmra.mrb[0].mxu0 %v326
        %v903 = vpop.f32.mrb[0].mxu0
        %v904 = vadd.f32 %v417, %v903
        %v905 = vpop.f32.mrb[0].mxu0
        %v906 = vadd.f32 %v421, %v905
        %v907 = vpop.f32.mrb[0].mxu0
        %v908 = vadd.f32 %v417, %v907
        %v909 = vpop.f32.mrb[0].mxu0
        %v910 = vadd.f32 %v421, %v909
        %911 = vmatprep.mubr.bf16.mxu0 %v329
        %912 = vmatmul.mubr.bf16.gmra.mrb[0].mxu0 %v328
        %v913 = vpop.f32.mrb[0].mxu0
        %v914 = vadd.f32 %v417, %v913
        %v915 = vpop.f32.mrb[0].mxu0
        %v916 = vadd.f32 %v421, %v915
        %v917 = vpop.f32.mrb[0].mxu0
        %v918 = vadd.f32 %v417, %v917
        %v919 = vpop.f32.mrb[0].mxu0
        %v920 = vadd.f32 %v421, %v919
        %921 = vmatprep.mubr.bf16.mxu0 %v331
        %922 = vmatmul.mubr.bf16.gmra.mrb[0].mxu0 %v330
        %v923 = vpop.f32.mrb[0].mxu0
        %v924 = vadd.f32 %v417, %v923
        %v925 = vpop.f32.mrb[0].mxu0
        %v926 = vadd.f32 %v421, %v925
        %v927 = vpop.f32.mrb[0].mxu0
        %v928 = vadd.f32 %v417, %v927
        %v929 = vpop.f32.mrb[0].mxu0
        %v930 = vadd.f32 %v421, %v929
        %931 = vmatprep.mubr.bf16.mxu0 %v333
        %932 = vmatmul.mubr.bf16.gmra.mrb[0].mxu0 %v332
        %v933 = vpop.f32.mrb[0].mxu0
        %v934 = vadd.f32 %v417, %v933
        %v935 = vpop.f32.mrb[0].mxu0
        %v936 = vadd.f32 %v421, %v935
        %v937 = vpop.f32.mrb[0].mxu0
        %v938 = vadd.f32 %v417, %v937
        %v939 = vpop.f32.mrb[0].mxu0
        %v940 = vadd.f32 %v421, %v939
        %941 = vmatprep.mubr.bf16.mxu0 %v335
        %942 = vmatmul.mubr.bf16.gmra.mrb[0].mxu0 %v334
        %v943 = vpop.f32.mrb[0].mxu0
        %v944 = vadd.f32 %v417, %v943
        %v945 = vpop.f32.mrb[0].mxu0
        %v946 = vadd.f32 %v421, %v945
        %v947 = vpop.f32.mrb[0].mxu0
        %v948 = vadd.f32 %v417, %v947
        %v949 = vpop.f32.mrb[0].mxu0
        %v950 = vadd.f32 %v421, %v949
        %951 = vmatprep.mubr.bf16.mxu0 %v337
        %952 = vmatmul.mubr.bf16.gmra.mrb[0].mxu0 %v336
        %v953 = vpop.f32.mrb[0].mxu0
        %v954 = vadd.f32 %v417, %v953
        %v955 = vpop.f32.mrb[0].mxu0
        %v956 = vadd.f32 %v421, %v955
        %v957 = vpop.f32.mrb[0].mxu0
        %v958 = vadd.f32 %v417, %v957
        %v959 = vpop.f32.mrb[0].mxu0
        %v960 = vadd.f32 %v421, %v959
        %961 = vmatprep.mubr.bf16.mxu0 %v339
        %962 = vmatmul.mubr.bf16.gmra.mrb[0].mxu0 %v338
        %v963 = vpop.f32.mrb[0].mxu0
        %v964 = vadd.f32 %v417, %v963
        %v965 = vpop.f32.mrb[0].mxu0
        %v966 = vadd.f32 %v421, %v965
        %v967 = vpop.f32.mrb[0].mxu0
        %v968 = vadd.f32 %v417, %v967
        %v969 = vpop.f32.mrb[0].mxu0
        %v970 = vadd.f32 %v421, %v969
        %971 = vdwg.mxu0
        %v972 = vmax.f32 %v781, 0.0
        %v973 = vmax.f32 %v783, 0.0
        %v974 = vmax.f32 %v894, 0.0
        %v975 = vmax.f32 %v896, 0.0
        %v976 = vmax.f32 %v785, 0.0
        %v977 = vmax.f32 %v787, 0.0
        %v978 = vmax.f32 %v898, 0.0
        %v979 = vmax.f32 %v900, 0.0
        %v980 = vmax.f32 %v791, 0.0
        %v981 = vmax.f32 %v793, 0.0
        %v982 = vmax.f32 %v904, 0.0
        %v983 = vmax.f32 %v906, 0.0
        %v984 = vmax.f32 %v795, 0.0
        %v985 = vmax.f32 %v797, 0.0
        %v986 = vmax.f32 %v908, 0.0
        %v987 = vmax.f32 %v910, 0.0
        %v988 = vmax.f32 %v801, 0.0
        %v989 = vmax.f32 %v803, 0.0
        %v990 = vmax.f32 %v914, 0.0
        %v991 = vmax.f32 %v916, 0.0
        %v992 = vmax.f32 %v805, 0.0
        %v993 = vmax.f32 %v807, 0.0
        %v994 = vmax.f32 %v918, 0.0
        %v995 = vmax.f32 %v920, 0.0
        %v996 = vmax.f32 %v811, 0.0
        %v997 = vmax.f32 %v813, 0.0
        %v998 = vmax.f32 %v924, 0.0
        %v999 = vmax.f32 %v926, 0.0
        %v1000 = vmax.f32 %v815, 0.0
        %v1001 = vmax.f32 %v817, 0.0
        %v1002 = vmax.f32 %v928, 0.0
        %v1003 = vmax.f32 %v930, 0.0
        %v1004 = vmax.f32 %v821, 0.0
        %v1005 = vmax.f32 %v823, 0.0
        %v1006 = vmax.f32 %v934, 0.0
        %v1007 = vmax.f32 %v936, 0.0
        %v1008 = vmax.f32 %v825, 0.0
        %v1009 = vmax.f32 %v827, 0.0
        %v1010 = vmax.f32 %v938, 0.0
        %v1011 = vmax.f32 %v940, 0.0
        %v1012 = vmax.f32 %v831, 0.0
        %v1013 = vmax.f32 %v833, 0.0
        %v1014 = vmax.f32 %v944, 0.0
        %v1015 = vmax.f32 %v946, 0.0
        %v1016 = vmax.f32 %v835, 0.0
        %v1017 = vmax.f32 %v837, 0.0
        %v1018 = vmax.f32 %v948, 0.0
        %v1019 = vmax.f32 %v950, 0.0
        %v1020 = vmax.f32 %v841, 0.0
        %v1021 = vmax.f32 %v843, 0.0
        %v1022 = vmax.f32 %v954, 0.0
        %v1023 = vmax.f32 %v956, 0.0
        %v1024 = vmax.f32 %v845, 0.0
        %v1025 = vmax.f32 %v847, 0.0
        %v1026 = vmax.f32 %v958, 0.0
        %v1027 = vmax.f32 %v960, 0.0
        %v1028 = vmax.f32 %v851, 0.0
        %v1029 = vmax.f32 %v853, 0.0
        %v1030 = vmax.f32 %v964, 0.0
        %v1031 = vmax.f32 %v966, 0.0
        %v1032 = vmax.f32 %v855, 0.0
        %v1033 = vmax.f32 %v857, 0.0
        %v1034 = vmax.f32 %v968, 0.0
        %v1035 = vmax.f32 %v970, 0.0
        %v1036 = vpack.c.bf16 %v976, %v972
        %v1037 = vpack.c.bf16 %v977, %v973
        %v1038 = vpack.c.bf16 %v978, %v974
        %v1039 = vpack.c.bf16 %v979, %v975
        %v1040 = vpack.c.bf16 %v984, %v980
        %v1041 = vpack.c.bf16 %v985, %v981
        %v1042 = vpack.c.bf16 %v986, %v982
        %v1043 = vpack.c.bf16 %v987, %v983
        %v1044 = vpack.c.bf16 %v992, %v988
        %v1045 = vpack.c.bf16 %v993, %v989
        %v1046 = vpack.c.bf16 %v994, %v990
        %v1047 = vpack.c.bf16 %v995, %v991
        %v1048 = vpack.c.bf16 %v1000, %v996
        %v1049 = vpack.c.bf16 %v1001, %v997
        %v1050 = vpack.c.bf16 %v1002, %v998
        %v1051 = vpack.c.bf16 %v1003, %v999
        %v1052 = vpack.c.bf16 %v1008, %v1004
        %v1053 = vpack.c.bf16 %v1009, %v1005
        %v1054 = vpack.c.bf16 %v1010, %v1006
        %v1055 = vpack.c.bf16 %v1011, %v1007
        %v1056 = vpack.c.bf16 %v1016, %v1012
        %v1057 = vpack.c.bf16 %v1017, %v1013
        %v1058 = vpack.c.bf16 %v1018, %v1014
        %v1059 = vpack.c.bf16 %v1019, %v1015
        %v1060 = vpack.c.bf16 %v1024, %v1020
        %v1061 = vpack.c.bf16 %v1025, %v1021
        %v1062 = vpack.c.bf16 %v1026, %v1022
        %v1063 = vpack.c.bf16 %v1027, %v1023
        %v1064 = vpack.c.bf16 %v1032, %v1028
        %v1065 = vpack.c.bf16 %v1033, %v1029
        %v1066 = vpack.c.bf16 %v1034, %v1030
        %v1067 = vpack.c.bf16 %v1035, %v1031
        %v1068 = vld [vmem:[#allocation7] sm:$0xff]
        %v1069 = vld [vmem:[#allocation7 + $0x8] sm:$0xff]
        %v1070 = vld [vmem:[#allocation7 + $0x10] sm:$0xff]
        %v1071 = vld [vmem:[#allocation7 + $0x18] sm:$0xff]
        %v1072 = vld [vmem:[#allocation7 + $0x20] sm:$0xff]
        %v1073 = vld [vmem:[#allocation7 + $0x28] sm:$0xff]
        %v1074 = vld [vmem:[#allocation7 + $0x30] sm:$0xff]
        %v1075 = vld [vmem:[#allocation7 + $0x38] sm:$0xff]
        %v1076 = vld [vmem:[#allocation7 + $0x40] sm:$0xff]
        %v1077 = vld [vmem:[#allocation7 + $0x48] sm:$0xff]
        %v1078 = vld [vmem:[#allocation7 + $0x50] sm:$0xff]
        %v1079 = vld [vmem:[#allocation7 + $0x58] sm:$0xff]
        %v1080 = vld [vmem:[#allocation7 + $0x60] sm:$0xff]
        %v1081 = vld [vmem:[#allocation7 + $0x68] sm:$0xff]
        %v1082 = vld [vmem:[#allocation7 + $0x70] sm:$0xff]
        %v1083 = vld [vmem:[#allocation7 + $0x78] sm:$0xff]
        %v1084 = vld [vmem:[#allocation7 + $0x80] sm:$0xff]
        %v1085 = vld [vmem:[#allocation7 + $0x88] sm:$0xff]
        %v1086 = vld [vmem:[#allocation7 + $0x90] sm:$0xff]
        %v1087 = vld [vmem:[#allocation7 + $0x98] sm:$0xff]
        %v1088 = vld [vmem:[#allocation7 + $0xa0] sm:$0xff]
        %v1089 = vld [vmem:[#allocation7 + $0xa8] sm:$0xff]
        %v1090 = vld [vmem:[#allocation7 + $0xb0] sm:$0xff]
        %v1091 = vld [vmem:[#allocation7 + $0xb8] sm:$0xff]
        %v1092 = vld [vmem:[#allocation7 + $0xc0] sm:$0xff]
        %v1093 = vld [vmem:[#allocation7 + $0xc8] sm:$0xff]
        %v1094 = vld [vmem:[#allocation7 + $0xd0] sm:$0xff]
        %v1095 = vld [vmem:[#allocation7 + $0xd8] sm:$0xff]
        %v1096 = vld [vmem:[#allocation7 + $0xe0] sm:$0xff]
        %v1097 = vld [vmem:[#allocation7 + $0xe8] sm:$0xff]
        %v1098 = vld [vmem:[#allocation7 + $0xf0] sm:$0xff]
        %v1099 = vld [vmem:[#allocation7 + $0xf8] sm:$0xff]
        %v1100 = vld [vmem:[#allocation7 + $0x100] sm:$0xff]
        %v1101 = vld [vmem:[#allocation7 + $0x108] sm:$0xff]
        %v1102 = vld [vmem:[#allocation7 + $0x110] sm:$0xff]
        %v1103 = vld [vmem:[#allocation7 + $0x118] sm:$0xff]
        %v1104 = vld [vmem:[#allocation7 + $0x120] sm:$0xff]
        %v1105 = vld [vmem:[#allocation7 + $0x128] sm:$0xff]
        %v1106 = vld [vmem:[#allocation7 + $0x130] sm:$0xff]
        %v1107 = vld [vmem:[#allocation7 + $0x138] sm:$0xff]
        %v1108 = vld [vmem:[#allocation7 + $0x140] sm:$0xff]
        %v1109 = vld [vmem:[#allocation7 + $0x148] sm:$0xff]
        %v1110 = vld [vmem:[#allocation7 + $0x150] sm:$0xff]
        %v1111 = vld [vmem:[#allocation7 + $0x158] sm:$0xff]
        %v1112 = vld [vmem:[#allocation7 + $0x160] sm:$0xff]
        %v1113 = vld [vmem:[#allocation7 + $0x168] sm:$0xff]
        %v1114 = vld [vmem:[#allocation7 + $0x170] sm:$0xff]
        %v1115 = vld [vmem:[#allocation7 + $0x178] sm:$0xff]
        %v1116 = vld [vmem:[#allocation7 + $0x180] sm:$0xff]
        %v1117 = vld [vmem:[#allocation7 + $0x188] sm:$0xff]
        %v1118 = vld [vmem:[#allocation7 + $0x190] sm:$0xff]
        %v1119 = vld [vmem:[#allocation7 + $0x198] sm:$0xff]
        %v1120 = vld [vmem:[#allocation7 + $0x1a0] sm:$0xff]
        %v1121 = vld [vmem:[#allocation7 + $0x1a8] sm:$0xff]
        %v1122 = vld [vmem:[#allocation7 + $0x1b0] sm:$0xff]
        %v1123 = vld [vmem:[#allocation7 + $0x1b8] sm:$0xff]
        %v1124 = vld [vmem:[#allocation7 + $0x1c0] sm:$0xff]
        %v1125 = vld [vmem:[#allocation7 + $0x1c8] sm:$0xff]
        %v1126 = vld [vmem:[#allocation7 + $0x1d0] sm:$0xff]
        %v1127 = vld [vmem:[#allocation7 + $0x1d8] sm:$0xff]
        %v1128 = vld [vmem:[#allocation7 + $0x1e0] sm:$0xff]
        %v1129 = vld [vmem:[#allocation7 + $0x1e8] sm:$0xff]
        %v1130 = vld [vmem:[#allocation7 + $0x1f0] sm:$0xff]
        %v1131 = vld [vmem:[#allocation7 + $0x1f8] sm:$0xff]
        %v1132 = vld [vmem:[%s4] sm:$0x3]
        %v1134 = vlaneseq
        %v1135 = vshrl.u32 %v1134, 7
        %v1136 = vsub.s32 0, %v1135
        %v1137 = vrot.slane %v1132, %v1136
        %v1138 = vlaneseq
        %v1139 = vshrl.u32 %v1138, 7
        %v1140 = vsub.s32 1, %v1139
        %v1141 = vrot.slane %v1132, %v1140
        %v1208 = vunpack.c.l.b16 %v1068
        %v1209 = vunpack.c.h.b16 %v1068
        %v1210 = vunpack.c.l.b16 %v1069
        %v1211 = vunpack.c.h.b16 %v1069
        %v1212 = vunpack.c.l.b16 %v1070
        %v1213 = vunpack.c.h.b16 %v1070
        %v1214 = vunpack.c.l.b16 %v1071
        %v1215 = vunpack.c.h.b16 %v1071
        %v1216 = vunpack.c.l.b16 %v1072
        %v1217 = vunpack.c.h.b16 %v1072
        %v1218 = vunpack.c.l.b16 %v1073
        %v1219 = vunpack.c.h.b16 %v1073
        %v1220 = vunpack.c.l.b16 %v1074
        %v1221 = vunpack.c.h.b16 %v1074
        %v1222 = vunpack.c.l.b16 %v1075
        %v1223 = vunpack.c.h.b16 %v1075
        %v1224 = vunpack.c.l.b16 %v1076
        %v1225 = vunpack.c.h.b16 %v1076
        %v1226 = vunpack.c.l.b16 %v1077
        %v1227 = vunpack.c.h.b16 %v1077
        %v1228 = vunpack.c.l.b16 %v1078
        %v1229 = vunpack.c.h.b16 %v1078
        %v1230 = vunpack.c.l.b16 %v1079
        %v1231 = vunpack.c.h.b16 %v1079
        %v1232 = vunpack.c.l.b16 %v1080
        %v1233 = vunpack.c.h.b16 %v1080
        %v1234 = vunpack.c.l.b16 %v1081
        %v1235 = vunpack.c.h.b16 %v1081
        %v1236 = vunpack.c.l.b16 %v1082
        %v1237 = vunpack.c.h.b16 %v1082
        %v1238 = vunpack.c.l.b16 %v1083
        %v1239 = vunpack.c.h.b16 %v1083
        %v1240 = vunpack.c.l.b16 %v1084
        %v1241 = vunpack.c.h.b16 %v1084
        %v1242 = vunpack.c.l.b16 %v1085
        %v1243 = vunpack.c.h.b16 %v1085
        %v1244 = vunpack.c.l.b16 %v1086
        %v1245 = vunpack.c.h.b16 %v1086
        %v1246 = vunpack.c.l.b16 %v1087
        %v1247 = vunpack.c.h.b16 %v1087
        %v1248 = vunpack.c.l.b16 %v1088
        %v1249 = vunpack.c.h.b16 %v1088
        %v1250 = vunpack.c.l.b16 %v1089
        %v1251 = vunpack.c.h.b16 %v1089
        %v1252 = vunpack.c.l.b16 %v1090
        %v1253 = vunpack.c.h.b16 %v1090
        %v1254 = vunpack.c.l.b16 %v1091
        %v1255 = vunpack.c.h.b16 %v1091
        %v1256 = vunpack.c.l.b16 %v1092
        %v1257 = vunpack.c.h.b16 %v1092
        %v1258 = vunpack.c.l.b16 %v1093
        %v1259 = vunpack.c.h.b16 %v1093
        %v1260 = vunpack.c.l.b16 %v1094
        %v1261 = vunpack.c.h.b16 %v1094
        %v1262 = vunpack.c.l.b16 %v1095
        %v1263 = vunpack.c.h.b16 %v1095
        %v1264 = vunpack.c.l.b16 %v1096
        %v1265 = vunpack.c.h.b16 %v1096
        %v1266 = vunpack.c.l.b16 %v1097
        %v1267 = vunpack.c.h.b16 %v1097
        %v1268 = vunpack.c.l.b16 %v1098
        %v1269 = vunpack.c.h.b16 %v1098
        %v1270 = vunpack.c.l.b16 %v1099
        %v1271 = vunpack.c.h.b16 %v1099
        %v1272 = vunpack.c.l.b16 %v1100
        %v1273 = vunpack.c.h.b16 %v1100
        %v1274 = vunpack.c.l.b16 %v1101
        %v1275 = vunpack.c.h.b16 %v1101
        %v1276 = vunpack.c.l.b16 %v1102
        %v1277 = vunpack.c.h.b16 %v1102
        %v1278 = vunpack.c.l.b16 %v1103
        %v1279 = vunpack.c.h.b16 %v1103
        %v1280 = vunpack.c.l.b16 %v1104
        %v1281 = vunpack.c.h.b16 %v1104
        %v1282 = vunpack.c.l.b16 %v1105
        %v1283 = vunpack.c.h.b16 %v1105
        %v1284 = vunpack.c.l.b16 %v1106
        %v1285 = vunpack.c.h.b16 %v1106
        %v1286 = vunpack.c.l.b16 %v1107
        %v1287 = vunpack.c.h.b16 %v1107
        %v1288 = vunpack.c.l.b16 %v1108
        %v1289 = vunpack.c.h.b16 %v1108
        %v1290 = vunpack.c.l.b16 %v1109
        %v1291 = vunpack.c.h.b16 %v1109
        %v1292 = vunpack.c.l.b16 %v1110
        %v1293 = vunpack.c.h.b16 %v1110
        %v1294 = vunpack.c.l.b16 %v1111
        %v1295 = vunpack.c.h.b16 %v1111
        %v1296 = vunpack.c.l.b16 %v1112
        %v1297 = vunpack.c.h.b16 %v1112
        %v1298 = vunpack.c.l.b16 %v1113
        %v1299 = vunpack.c.h.b16 %v1113
        %v1300 = vunpack.c.l.b16 %v1114
        %v1301 = vunpack.c.h.b16 %v1114
        %v1302 = vunpack.c.l.b16 %v1115
        %v1303 = vunpack.c.h.b16 %v1115
        %v1304 = vunpack.c.l.b16 %v1116
        %v1305 = vunpack.c.h.b16 %v1116
        %v1306 = vunpack.c.l.b16 %v1117
        %v1307 = vunpack.c.h.b16 %v1117
        %v1308 = vunpack.c.l.b16 %v1118
        %v1309 = vunpack.c.h.b16 %v1118
        %v1310 = vunpack.c.l.b16 %v1119
        %v1311 = vunpack.c.h.b16 %v1119
        %v1312 = vunpack.c.l.b16 %v1120
        %v1313 = vunpack.c.h.b16 %v1120
        %v1314 = vunpack.c.l.b16 %v1121
        %v1315 = vunpack.c.h.b16 %v1121
        %v1316 = vunpack.c.l.b16 %v1122
        %v1317 = vunpack.c.h.b16 %v1122
        %v1318 = vunpack.c.l.b16 %v1123
        %v1319 = vunpack.c.h.b16 %v1123
        %v1320 = vunpack.c.l.b16 %v1124
        %v1321 = vunpack.c.h.b16 %v1124
        %v1322 = vunpack.c.l.b16 %v1125
        %v1323 = vunpack.c.h.b16 %v1125
        %v1324 = vunpack.c.l.b16 %v1126
        %v1325 = vunpack.c.h.b16 %v1126
        %v1326 = vunpack.c.l.b16 %v1127
        %v1327 = vunpack.c.h.b16 %v1127
        %v1328 = vunpack.c.l.b16 %v1128
        %v1329 = vunpack.c.h.b16 %v1128
        %v1330 = vunpack.c.l.b16 %v1129
        %v1331 = vunpack.c.h.b16 %v1129
        %v1332 = vunpack.c.l.b16 %v1130
        %v1333 = vunpack.c.h.b16 %v1130
        %v1334 = vunpack.c.l.b16 %v1131
        %v1335 = vunpack.c.h.b16 %v1131
        %v1336 = vpack.c.b16 %v1210, %v1208
        %v1337 = vpack.c.b16 %v1211, %v1209
        %v1338 = vpack.c.b16 %v1214, %v1212
        %v1339 = vpack.c.b16 %v1215, %v1213
        %v1340 = vpack.c.b16 %v1218, %v1216
        %v1341 = vpack.c.b16 %v1219, %v1217
        %v1342 = vpack.c.b16 %v1222, %v1220
        %v1343 = vpack.c.b16 %v1223, %v1221
        %v1344 = vpack.c.b16 %v1226, %v1224
        %v1345 = vpack.c.b16 %v1227, %v1225
        %v1346 = vpack.c.b16 %v1230, %v1228
        %v1347 = vpack.c.b16 %v1231, %v1229
        %v1348 = vpack.c.b16 %v1234, %v1232
        %v1349 = vpack.c.b16 %v1235, %v1233
        %v1350 = vpack.c.b16 %v1238, %v1236
        %v1351 = vpack.c.b16 %v1239, %v1237
        %v1352 = vpack.c.b16 %v1242, %v1240
        %v1353 = vpack.c.b16 %v1243, %v1241
        %v1354 = vpack.c.b16 %v1246, %v1244
        %v1355 = vpack.c.b16 %v1247, %v1245
        %v1356 = vpack.c.b16 %v1250, %v1248
        %v1357 = vpack.c.b16 %v1251, %v1249
        %v1358 = vpack.c.b16 %v1254, %v1252
        %v1359 = vpack.c.b16 %v1255, %v1253
        %v1360 = vpack.c.b16 %v1258, %v1256
        %v1361 = vpack.c.b16 %v1259, %v1257
        %v1362 = vpack.c.b16 %v1262, %v1260
        %v1363 = vpack.c.b16 %v1263, %v1261
        %v1364 = vpack.c.b16 %v1266, %v1264
        %v1365 = vpack.c.b16 %v1267, %v1265
        %v1366 = vpack.c.b16 %v1270, %v1268
        %v1367 = vpack.c.b16 %v1271, %v1269
        %v1368 = vpack.c.b16 %v1274, %v1272
        %v1369 = vpack.c.b16 %v1275, %v1273
        %v1370 = vpack.c.b16 %v1278, %v1276
        %v1371 = vpack.c.b16 %v1279, %v1277
        %v1372 = vpack.c.b16 %v1282, %v1280
        %v1373 = vpack.c.b16 %v1283, %v1281
        %v1374 = vpack.c.b16 %v1286, %v1284
        %v1375 = vpack.c.b16 %v1287, %v1285
        %v1376 = vpack.c.b16 %v1290, %v1288
        %v1377 = vpack.c.b16 %v1291, %v1289
        %v1378 = vpack.c.b16 %v1294, %v1292
        %v1379 = vpack.c.b16 %v1295, %v1293
        %v1380 = vpack.c.b16 %v1298, %v1296
        %v1381 = vpack.c.b16 %v1299, %v1297
        %v1382 = vpack.c.b16 %v1302, %v1300
        %v1383 = vpack.c.b16 %v1303, %v1301
        %v1384 = vpack.c.b16 %v1306, %v1304
        %v1385 = vpack.c.b16 %v1307, %v1305
        %v1386 = vpack.c.b16 %v1310, %v1308
        %v1387 = vpack.c.b16 %v1311, %v1309
        %v1388 = vpack.c.b16 %v1314, %v1312
        %v1389 = vpack.c.b16 %v1315, %v1313
        %v1390 = vpack.c.b16 %v1318, %v1316
        %v1391 = vpack.c.b16 %v1319, %v1317
        %v1392 = vpack.c.b16 %v1322, %v1320
        %v1393 = vpack.c.b16 %v1323, %v1321
        %v1394 = vpack.c.b16 %v1326, %v1324
        %v1395 = vpack.c.b16 %v1327, %v1325
        %v1396 = vpack.c.b16 %v1330, %v1328
        %v1397 = vpack.c.b16 %v1331, %v1329
        %v1398 = vpack.c.b16 %v1334, %v1332
        %v1399 = vpack.c.b16 %v1335, %v1333
        %1464 = vmatprep.subr.bf16.mxu0 %v1337
        %1465 = vmatpush1.bf16.msra.mxu0 %v1336
        %1466 = vmatprep.subr.bf16.mxu0 %v1339
        %1467 = vmatpush1.bf16.msra.mxu0 %v1338
        %1468 = vmatprep.subr.bf16.mxu0 %v1341
        %1469 = vmatpush1.bf16.msra.mxu0 %v1340
        %1470 = vmatprep.subr.bf16.mxu0 %v1343
        %1471 = vmatpush1.bf16.msra.mxu0 %v1342
        %1472 = vmatprep.subr.bf16.mxu0 %v1345
        %1473 = vmatpush1.bf16.msra.mxu0 %v1344
        %1474 = vmatprep.subr.bf16.mxu0 %v1347
        %1475 = vmatpush1.bf16.msra.mxu0 %v1346
        %1476 = vmatprep.subr.bf16.mxu0 %v1349
        %1477 = vmatpush1.bf16.msra.mxu0 %v1348
        %1478 = vmatprep.subr.bf16.mxu0 %v1351
        %1479 = vmatpush1.bf16.msra.mxu0 %v1350
        %1480 = vmatprep.subr.bf16.mxu0 %v1353
        %1481 = vmatpush1.bf16.msra.mxu0 %v1352
        %1482 = vmatprep.subr.bf16.mxu0 %v1355
        %1483 = vmatpush1.bf16.msra.mxu0 %v1354
        %1484 = vmatprep.subr.bf16.mxu0 %v1357
        %1485 = vmatpush1.bf16.msra.mxu0 %v1356
        %1486 = vmatprep.subr.bf16.mxu0 %v1359
        %1487 = vmatpush1.bf16.msra.mxu0 %v1358
        %1488 = vmatprep.subr.bf16.mxu0 %v1361
        %1489 = vmatpush1.bf16.msra.mxu0 %v1360
        %1490 = vmatprep.subr.bf16.mxu0 %v1363
        %1491 = vmatpush1.bf16.msra.mxu0 %v1362
        %1492 = vmatprep.subr.bf16.mxu0 %v1365
        %1493 = vmatpush1.bf16.msra.mxu0 %v1364
        %1494 = vmatprep.subr.bf16.mxu0 %v1367
        %1495 = vmatpush1.bf16.msra.mxu0 %v1366
        %1496 = vmatprep.mubr.bf16.mxu0 %v1037
        %1497 = vmatmul.mubr.bf16.gmra.mrb[0].mxu0 %v1036
        %v1498 = vpop.f32.mrb[0].mxu0
        %v1499 = vadd.f32 %v1137, %v1498
        %v1500 = vpop.f32.mrb[0].mxu0
        %v1501 = vadd.f32 %v1141, %v1500
        %v1502 = vpop.f32.mrb[0].mxu0
        %v1503 = vadd.f32 %v1137, %v1502
        %v1504 = vpop.f32.mrb[0].mxu0
        %v1505 = vadd.f32 %v1141, %v1504
        %1506 = vmatprep.mubr.bf16.mxu0 %v1041
        %1507 = vmatmul.mubr.bf16.gmra.mrb[0].mxu0 %v1040
        %v1508 = vpop.f32.mrb[0].mxu0
        %v1509 = vadd.f32 %v1137, %v1508
        %v1510 = vpop.f32.mrb[0].mxu0
        %v1511 = vadd.f32 %v1141, %v1510
        %v1512 = vpop.f32.mrb[0].mxu0
        %v1513 = vadd.f32 %v1137, %v1512
        %v1514 = vpop.f32.mrb[0].mxu0
        %v1515 = vadd.f32 %v1141, %v1514
        %1516 = vmatprep.mubr.bf16.mxu0 %v1045
        %1517 = vmatmul.mubr.bf16.gmra.mrb[0].mxu0 %v1044
        %v1518 = vpop.f32.mrb[0].mxu0
        %v1519 = vadd.f32 %v1137, %v1518
        %v1520 = vpop.f32.mrb[0].mxu0
        %v1521 = vadd.f32 %v1141, %v1520
        %v1522 = vpop.f32.mrb[0].mxu0
        %v1523 = vadd.f32 %v1137, %v1522
        %v1524 = vpop.f32.mrb[0].mxu0
        %v1525 = vadd.f32 %v1141, %v1524
        %1526 = vmatprep.mubr.bf16.mxu0 %v1049
        %1527 = vmatmul.mubr.bf16.gmra.mrb[0].mxu0 %v1048
        %v1528 = vpop.f32.mrb[0].mxu0
        %v1529 = vadd.f32 %v1137, %v1528
        %v1530 = vpop.f32.mrb[0].mxu0
        %v1531 = vadd.f32 %v1141, %v1530
        %v1532 = vpop.f32.mrb[0].mxu0
        %v1533 = vadd.f32 %v1137, %v1532
        %v1534 = vpop.f32.mrb[0].mxu0
        %v1535 = vadd.f32 %v1141, %v1534
        %1536 = vmatprep.mubr.bf16.mxu0 %v1053
        %1537 = vmatmul.mubr.bf16.gmra.mrb[0].mxu0 %v1052
        %v1538 = vpop.f32.mrb[0].mxu0
        %v1539 = vadd.f32 %v1137, %v1538
        %v1540 = vpop.f32.mrb[0].mxu0
        %v1541 = vadd.f32 %v1141, %v1540
        %v1542 = vpop.f32.mrb[0].mxu0
        %v1543 = vadd.f32 %v1137, %v1542
        %v1544 = vpop.f32.mrb[0].mxu0
        %v1545 = vadd.f32 %v1141, %v1544
        %1546 = vmatprep.mubr.bf16.mxu0 %v1057
        %1547 = vmatmul.mubr.bf16.gmra.mrb[0].mxu0 %v1056
        %v1548 = vpop.f32.mrb[0].mxu0
        %v1549 = vadd.f32 %v1137, %v1548
        %v1550 = vpop.f32.mrb[0].mxu0
        %v1551 = vadd.f32 %v1141, %v1550
        %v1552 = vpop.f32.mrb[0].mxu0
        %v1553 = vadd.f32 %v1137, %v1552
        %v1554 = vpop.f32.mrb[0].mxu0
        %v1555 = vadd.f32 %v1141, %v1554
        %1556 = vmatprep.mubr.bf16.mxu0 %v1061
        %1557 = vmatmul.mubr.bf16.gmra.mrb[0].mxu0 %v1060
        %v1558 = vpop.f32.mrb[0].mxu0
        %v1559 = vadd.f32 %v1137, %v1558
        %v1560 = vpop.f32.mrb[0].mxu0
        %v1561 = vadd.f32 %v1141, %v1560
        %v1562 = vpop.f32.mrb[0].mxu0
        %v1563 = vadd.f32 %v1137, %v1562
        %v1564 = vpop.f32.mrb[0].mxu0
        %v1565 = vadd.f32 %v1141, %v1564
        %1566 = vmatprep.mubr.bf16.mxu0 %v1065
        %1567 = vmatmul.mubr.bf16.gmra.mrb[0].mxu0 %v1064
        %v1568 = vpop.f32.mrb[0].mxu0
        %v1569 = vadd.f32 %v1137, %v1568
        %v1570 = vpop.f32.mrb[0].mxu0
        %v1571 = vadd.f32 %v1141, %v1570
        %v1572 = vpop.f32.mrb[0].mxu0
        %v1573 = vadd.f32 %v1137, %v1572
        %v1574 = vpop.f32.mrb[0].mxu0
        %v1575 = vadd.f32 %v1141, %v1574
        %1576 = vdwg.mxu0
        %1577 = vmatprep.subr.bf16.mxu0 %v1369
        %1578 = vmatpush1.bf16.msra.mxu0 %v1368
        %1579 = vmatprep.subr.bf16.mxu0 %v1371
        %1580 = vmatpush1.bf16.msra.mxu0 %v1370
        %1581 = vmatprep.subr.bf16.mxu0 %v1373
        %1582 = vmatpush1.bf16.msra.mxu0 %v1372
        %1583 = vmatprep.subr.bf16.mxu0 %v1375
        %1584 = vmatpush1.bf16.msra.mxu0 %v1374
        %1585 = vmatprep.subr.bf16.mxu0 %v1377
        %1586 = vmatpush1.bf16.msra.mxu0 %v1376
        %1587 = vmatprep.subr.bf16.mxu0 %v1379
        %1588 = vmatpush1.bf16.msra.mxu0 %v1378
        %1589 = vmatprep.subr.bf16.mxu0 %v1381
        %1590 = vmatpush1.bf16.msra.mxu0 %v1380
        %1591 = vmatprep.subr.bf16.mxu0 %v1383
        %1592 = vmatpush1.bf16.msra.mxu0 %v1382
        %1593 = vmatprep.subr.bf16.mxu0 %v1385
        %1594 = vmatpush1.bf16.msra.mxu0 %v1384
        %1595 = vmatprep.subr.bf16.mxu0 %v1387
        %1596 = vmatpush1.bf16.msra.mxu0 %v1386
        %1597 = vmatprep.subr.bf16.mxu0 %v1389
        %1598 = vmatpush1.bf16.msra.mxu0 %v1388
        %1599 = vmatprep.subr.bf16.mxu0 %v1391
        %1600 = vmatpush1.bf16.msra.mxu0 %v1390
        %1601 = vmatprep.subr.bf16.mxu0 %v1393
        %1602 = vmatpush1.bf16.msra.mxu0 %v1392
        %1603 = vmatprep.subr.bf16.mxu0 %v1395
        %1604 = vmatpush1.bf16.msra.mxu0 %v1394
        %1605 = vmatprep.subr.bf16.mxu0 %v1397
        %1606 = vmatpush1.bf16.msra.mxu0 %v1396
        %1607 = vmatprep.subr.bf16.mxu0 %v1399
        %1608 = vmatpush1.bf16.msra.mxu0 %v1398
        %1609 = vmatprep.mubr.bf16.mxu0 %v1039
        %1610 = vmatmul.mubr.bf16.gmra.mrb[0].mxu0 %v1038
        %v1611 = vpop.f32.mrb[0].mxu0
        %v1612 = vadd.f32 %v1499, %v1611
        %v1613 = vpop.f32.mrb[0].mxu0
        %v1614 = vadd.f32 %v1501, %v1613
        %v1615 = vpop.f32.mrb[0].mxu0
        %v1616 = vadd.f32 %v1503, %v1615
        %v1617 = vpop.f32.mrb[0].mxu0
        %v1618 = vadd.f32 %v1505, %v1617
        %1619 = vmatprep.mubr.bf16.mxu0 %v1043
        %1620 = vmatmul.mubr.bf16.gmra.mrb[0].mxu0 %v1042
        %v1621 = vpop.f32.mrb[0].mxu0
        %v1622 = vadd.f32 %v1509, %v1621
        %v1623 = vpop.f32.mrb[0].mxu0
        %v1624 = vadd.f32 %v1511, %v1623
        %v1625 = vpop.f32.mrb[0].mxu0
        %v1626 = vadd.f32 %v1513, %v1625
        %v1627 = vpop.f32.mrb[0].mxu0
        %v1628 = vadd.f32 %v1515, %v1627
        %1629 = vmatprep.mubr.bf16.mxu0 %v1047
        %1630 = vmatmul.mubr.bf16.gmra.mrb[0].mxu0 %v1046
        %v1631 = vpop.f32.mrb[0].mxu0
        %v1632 = vadd.f32 %v1519, %v1631
        %v1633 = vpop.f32.mrb[0].mxu0
        %v1634 = vadd.f32 %v1521, %v1633
        %v1635 = vpop.f32.mrb[0].mxu0
        %v1636 = vadd.f32 %v1523, %v1635
        %v1637 = vpop.f32.mrb[0].mxu0
        %v1638 = vadd.f32 %v1525, %v1637
        %1639 = vmatprep.mubr.bf16.mxu0 %v1051
        %1640 = vmatmul.mubr.bf16.gmra.mrb[0].mxu0 %v1050
        %v1641 = vpop.f32.mrb[0].mxu0
        %v1642 = vadd.f32 %v1529, %v1641
        %v1643 = vpop.f32.mrb[0].mxu0
        %v1644 = vadd.f32 %v1531, %v1643
        %v1645 = vpop.f32.mrb[0].mxu0
        %v1646 = vadd.f32 %v1533, %v1645
        %v1647 = vpop.f32.mrb[0].mxu0
        %v1648 = vadd.f32 %v1535, %v1647
        %1649 = vmatprep.mubr.bf16.mxu0 %v1055
        %1650 = vmatmul.mubr.bf16.gmra.mrb[0].mxu0 %v1054
        %v1651 = vpop.f32.mrb[0].mxu0
        %v1652 = vadd.f32 %v1539, %v1651
        %v1653 = vpop.f32.mrb[0].mxu0
        %v1654 = vadd.f32 %v1541, %v1653
        %v1655 = vpop.f32.mrb[0].mxu0
        %v1656 = vadd.f32 %v1543, %v1655
        %v1657 = vpop.f32.mrb[0].mxu0
        %v1658 = vadd.f32 %v1545, %v1657
        %1659 = vmatprep.mubr.bf16.mxu0 %v1059
        %1660 = vmatmul.mubr.bf16.gmra.mrb[0].mxu0 %v1058
        %v1661 = vpop.f32.mrb[0].mxu0
        %v1662 = vadd.f32 %v1549, %v1661
        %v1663 = vpop.f32.mrb[0].mxu0
        %v1664 = vadd.f32 %v1551, %v1663
        %v1665 = vpop.f32.mrb[0].mxu0
        %v1666 = vadd.f32 %v1553, %v1665
        %v1667 = vpop.f32.mrb[0].mxu0
        %v1668 = vadd.f32 %v1555, %v1667
        %1669 = vmatprep.mubr.bf16.mxu0 %v1063
        %1670 = vmatmul.mubr.bf16.gmra.mrb[0].mxu0 %v1062
        %v1671 = vpop.f32.mrb[0].mxu0
        %v1672 = vadd.f32 %v1559, %v1671
        %v1673 = vpop.f32.mrb[0].mxu0
        %v1674 = vadd.f32 %v1561, %v1673
        %v1675 = vpop.f32.mrb[0].mxu0
        %v1676 = vadd.f32 %v1563, %v1675
        %v1677 = vpop.f32.mrb[0].mxu0
        %v1678 = vadd.f32 %v1565, %v1677
        %1679 = vmatprep.mubr.bf16.mxu0 %v1067
        %1680 = vmatmul.mubr.bf16.gmra.mrb[0].mxu0 %v1066
        %v1681 = vpop.f32.mrb[0].mxu0
        %v1682 = vadd.f32 %v1569, %v1681
        %v1683 = vpop.f32.mrb[0].mxu0
        %v1684 = vadd.f32 %v1571, %v1683
        %v1685 = vpop.f32.mrb[0].mxu0
        %v1686 = vadd.f32 %v1573, %v1685
        %v1687 = vpop.f32.mrb[0].mxu0
        %v1688 = vadd.f32 %v1575, %v1687
        %1689 = vdwg.mxu0
        %v1690 = vmul.f32 %v1612, 0.5
        %v1691 = vmul.f32 %v1614, 0.5
        %v1692 = vmul.f32 %v1616, 0.5
        %v1693 = vmul.f32 %v1618, 0.5
        %v1694 = vmul.f32 %v1622, 0.5
        %v1695 = vmul.f32 %v1624, 0.5
        %v1696 = vmul.f32 %v1626, 0.5
        %v1697 = vmul.f32 %v1628, 0.5
        %v1698 = vmul.f32 %v1632, 0.5
        %v1699 = vmul.f32 %v1634, 0.5
        %v1700 = vmul.f32 %v1636, 0.5
        %v1701 = vmul.f32 %v1638, 0.5
        %v1702 = vmul.f32 %v1642, 0.5
        %v1703 = vmul.f32 %v1644, 0.5
        %v1704 = vmul.f32 %v1646, 0.5
        %v1705 = vmul.f32 %v1648, 0.5
        %v1706 = vmul.f32 %v1652, 0.5
        %v1707 = vmul.f32 %v1654, 0.5
        %v1708 = vmul.f32 %v1656, 0.5
        %v1709 = vmul.f32 %v1658, 0.5
        %v1710 = vmul.f32 %v1662, 0.5
        %v1711 = vmul.f32 %v1664, 0.5
        %v1712 = vmul.f32 %v1666, 0.5
        %v1713 = vmul.f32 %v1668, 0.5
        %v1714 = vmul.f32 %v1672, 0.5
        %v1715 = vmul.f32 %v1674, 0.5
        %v1716 = vmul.f32 %v1676, 0.5
        %v1717 = vmul.f32 %v1678, 0.5
        %v1718 = vmul.f32 %v1682, 0.5
        %v1719 = vmul.f32 %v1684, 0.5
        %v1720 = vmul.f32 %v1686, 0.5
        %v1721 = vmul.f32 %v1688, 0.5
        %v1722 = vtanh.pop %v1690
        %v1723 = vtanh.pop %v1691
        %v1724 = vtanh.pop %v1692
        %v1725 = vtanh.pop %v1693
        %v1726 = vtanh.pop %v1694
        %v1727 = vtanh.pop %v1695
        %v1728 = vtanh.pop %v1696
        %v1729 = vtanh.pop %v1697
        %v1730 = vtanh.pop %v1698
        %v1731 = vtanh.pop %v1699
        %v1732 = vtanh.pop %v1700
        %v1733 = vtanh.pop %v1701
        %v1734 = vtanh.pop %v1702
        %v1735 = vtanh.pop %v1703
        %v1736 = vtanh.pop %v1704
        %v1737 = vtanh.pop %v1705
        %v1738 = vtanh.pop %v1706
        %v1739 = vtanh.pop %v1707
        %v1740 = vtanh.pop %v1708
        %v1741 = vtanh.pop %v1709
        %v1742 = vtanh.pop %v1710
        %v1743 = vtanh.pop %v1711
        %v1744 = vtanh.pop %v1712
        %v1745 = vtanh.pop %v1713
        %v1746 = vtanh.pop %v1714
        %v1747 = vtanh.pop %v1715
        %v1748 = vtanh.pop %v1716
        %v1749 = vtanh.pop %v1717
        %v1750 = vtanh.pop %v1718
        %v1751 = vtanh.pop %v1719
        %v1752 = vtanh.pop %v1720
        %v1753 = vtanh.pop %v1721
        %v1754 = vmul.f32 %v1722, 0.5
        %v1755 = vmul.f32 %v1723, 0.5
        %v1756 = vmul.f32 %v1724, 0.5
        %v1757 = vmul.f32 %v1725, 0.5
        %v1758 = vmul.f32 %v1726, 0.5
        %v1759 = vmul.f32 %v1727, 0.5
        %v1760 = vmul.f32 %v1728, 0.5
        %v1761 = vmul.f32 %v1729, 0.5
        %v1762 = vmul.f32 %v1730, 0.5
        %v1763 = vmul.f32 %v1731, 0.5
        %v1764 = vmul.f32 %v1732, 0.5
        %v1765 = vmul.f32 %v1733, 0.5
        %v1766 = vmul.f32 %v1734, 0.5
        %v1767 = vmul.f32 %v1735, 0.5
        %v1768 = vmul.f32 %v1736, 0.5
        %v1769 = vmul.f32 %v1737, 0.5
        %v1770 = vmul.f32 %v1738, 0.5
        %v1771 = vmul.f32 %v1739, 0.5
        %v1772 = vmul.f32 %v1740, 0.5
        %v1773 = vmul.f32 %v1741, 0.5
        %v1774 = vmul.f32 %v1742, 0.5
        %v1775 = vmul.f32 %v1743, 0.5
        %v1776 = vmul.f32 %v1744, 0.5
        %v1777 = vmul.f32 %v1745, 0.5
        %v1778 = vmul.f32 %v1746, 0.5
        %v1779 = vmul.f32 %v1747, 0.5
        %v1780 = vmul.f32 %v1748, 0.5
        %v1781 = vmul.f32 %v1749, 0.5
        %v1782 = vmul.f32 %v1750, 0.5
        %v1783 = vmul.f32 %v1751, 0.5
        %v1784 = vmul.f32 %v1752, 0.5
        %v1785 = vmul.f32 %v1753, 0.5
        %v1786 = vadd.f32 %v1754, 0.5
        %v1787 = vadd.f32 %v1755, 0.5
        %v1788 = vadd.f32 %v1756, 0.5
        %v1789 = vadd.f32 %v1757, 0.5
        %v1790 = vadd.f32 %v1758, 0.5
        %v1791 = vadd.f32 %v1759, 0.5
        %v1792 = vadd.f32 %v1760, 0.5
        %v1793 = vadd.f32 %v1761, 0.5
        %v1794 = vadd.f32 %v1762, 0.5
        %v1795 = vadd.f32 %v1763, 0.5
        %v1796 = vadd.f32 %v1764, 0.5
        %v1797 = vadd.f32 %v1765, 0.5
        %v1798 = vadd.f32 %v1766, 0.5
        %v1799 = vadd.f32 %v1767, 0.5
        %v1800 = vadd.f32 %v1768, 0.5
        %v1801 = vadd.f32 %v1769, 0.5
        %v1802 = vadd.f32 %v1770, 0.5
        %v1803 = vadd.f32 %v1771, 0.5
        %v1804 = vadd.f32 %v1772, 0.5
        %v1805 = vadd.f32 %v1773, 0.5
        %v1806 = vadd.f32 %v1774, 0.5
        %v1807 = vadd.f32 %v1775, 0.5
        %v1808 = vadd.f32 %v1776, 0.5
        %v1809 = vadd.f32 %v1777, 0.5
        %v1810 = vadd.f32 %v1778, 0.5
        %v1811 = vadd.f32 %v1779, 0.5
        %v1812 = vadd.f32 %v1780, 0.5
        %v1813 = vadd.f32 %v1781, 0.5
        %v1814 = vadd.f32 %v1782, 0.5
        %v1815 = vadd.f32 %v1783, 0.5
        %v1816 = vadd.f32 %v1784, 0.5
        %v1817 = vadd.f32 %v1785, 0.5
        %v1818 = vpack.c.bf16 %v1788, %v1786
        %v1819 = vpack.c.bf16 %v1789, %v1787
        %v1820 = vpack.c.bf16 %v1792, %v1790
        %v1821 = vpack.c.bf16 %v1793, %v1791
        %v1822 = vpack.c.bf16 %v1796, %v1794
        %v1823 = vpack.c.bf16 %v1797, %v1795
        %v1824 = vpack.c.bf16 %v1800, %v1798
        %v1825 = vpack.c.bf16 %v1801, %v1799
        %v1826 = vpack.c.bf16 %v1804, %v1802
        %v1827 = vpack.c.bf16 %v1805, %v1803
        %v1828 = vpack.c.bf16 %v1808, %v1806
        %v1829 = vpack.c.bf16 %v1809, %v1807
        %v1830 = vpack.c.bf16 %v1812, %v1810
        %v1831 = vpack.c.bf16 %v1813, %v1811
        %v1832 = vpack.c.bf16 %v1816, %v1814
        %v1833 = vpack.c.bf16 %v1817, %v1815
        %v1850 = vunpack.c.l.b16 %v1818
        %v1851 = vunpack.c.l.b16 %v1819
        %v1852 = vunpack.c.h.b16 %v1818
        %v1853 = vunpack.c.h.b16 %v1819
        %v1854 = vunpack.c.l.b16 %v1820
        %v1855 = vunpack.c.l.b16 %v1821
        %v1856 = vunpack.c.h.b16 %v1820
        %v1857 = vunpack.c.h.b16 %v1821
        %v1858 = vunpack.c.l.b16 %v1822
        %v1859 = vunpack.c.l.b16 %v1823
        %v1860 = vunpack.c.h.b16 %v1822
        %v1861 = vunpack.c.h.b16 %v1823
        %v1862 = vunpack.c.l.b16 %v1824
        %v1863 = vunpack.c.l.b16 %v1825
        %v1864 = vunpack.c.h.b16 %v1824
        %v1865 = vunpack.c.h.b16 %v1825
        %v1866 = vunpack.c.l.b16 %v1826
        %v1867 = vunpack.c.l.b16 %v1827
        %v1868 = vunpack.c.h.b16 %v1826
        %v1869 = vunpack.c.h.b16 %v1827
        %v1870 = vunpack.c.l.b16 %v1828
        %v1871 = vunpack.c.l.b16 %v1829
        %v1872 = vunpack.c.h.b16 %v1828
        %v1873 = vunpack.c.h.b16 %v1829
        %v1874 = vunpack.c.l.b16 %v1830
        %v1875 = vunpack.c.l.b16 %v1831
        %v1876 = vunpack.c.h.b16 %v1830
        %v1877 = vunpack.c.h.b16 %v1831
        %v1878 = vunpack.c.l.b16 %v1832
        %v1879 = vunpack.c.l.b16 %v1833
        %v1880 = vunpack.c.h.b16 %v1832
        %v1881 = vunpack.c.h.b16 %v1833
        %v1882 = vpack.c.b16 %v1851, %v1850
        %v1883 = vpack.c.b16 %v1853, %v1852
        %v1884 = vpack.c.b16 %v1855, %v1854
        %v1885 = vpack.c.b16 %v1857, %v1856
        %v1886 = vpack.c.b16 %v1859, %v1858
        %v1887 = vpack.c.b16 %v1861, %v1860
        %v1888 = vpack.c.b16 %v1863, %v1862
        %v1889 = vpack.c.b16 %v1865, %v1864
        %v1890 = vpack.c.b16 %v1867, %v1866
        %v1891 = vpack.c.b16 %v1869, %v1868
        %v1892 = vpack.c.b16 %v1871, %v1870
        %v1893 = vpack.c.b16 %v1873, %v1872
        %v1894 = vpack.c.b16 %v1875, %v1874
        %v1895 = vpack.c.b16 %v1877, %v1876
        %v1896 = vpack.c.b16 %v1879, %v1878
        %v1897 = vpack.c.b16 %v1881, %v1880
        %1914 = vst [vmem:[%s279] sm:$0xff] %v1882
        %1915 = vst [vmem:[%s279 + $0x8] sm:$0xff] %v1883
        %1916 = vst [vmem:[%s279 + $0x10] sm:$0xff] %v1884
        %1917 = vst [vmem:[%s279 + $0x18] sm:$0xff] %v1885
        %1918 = vst [vmem:[%s279 + $0x20] sm:$0xff] %v1886
        %1919 = vst [vmem:[%s279 + $0x28] sm:$0xff] %v1887
        %1920 = vst [vmem:[%s279 + $0x30] sm:$0xff] %v1888
        %1921 = vst [vmem:[%s279 + $0x38] sm:$0xff] %v1889
        %1922 = vst [vmem:[%s279 + $0x40] sm:$0xff] %v1890
        %1923 = vst [vmem:[%s279 + $0x48] sm:$0xff] %v1891
        %1924 = vst [vmem:[%s279 + $0x50] sm:$0xff] %v1892
        %1925 = vst [vmem:[%s279 + $0x58] sm:$0xff] %v1893
        %1926 = vst [vmem:[%s279 + $0x60] sm:$0xff] %v1894
        %1927 = vst [vmem:[%s279 + $0x68] sm:$0xff] %v1895
        %1928 = vst [vmem:[%s279 + $0x70] sm:$0xff] %v1896
        %1929 = vst [vmem:[%s279 + $0x78] sm:$0xff] %v1897
        %s1930 = sand.u32 %s141, 1
        %s1931 = scalar_lea.sflag [#allocation4], %s1930
        %s1932 = sand.u32 %s141, 1
        %s1933 = smul.addr %s1932, 128
        %s1934 = scalar_lea.vmem [#allocation8], %s1933
        // Predicated region
        $region53: #{tpu_custom_call.1} parent=39 // pred_check
          %p1935 = pneg %p151
        $region54: #{tpu_custom_call.1} parent=39 // pred_check_branch
          %1937 = sbr.rel (%p1935) target = $region56
        $region55: #{tpu_custom_call.1} parent=39 // pred_region
          %s1938 = smul.u32 16, %s23
          %s1939 = ssub.s32 25, %s1938
          %p1940 = scmp.lt.s32.totalorder %s1939, 16
          %s1941 = scalar_select %p1940, %s1939, 16
          %s1942 = smul.u32 64, %s1941
          %s1943 = smul.u32 %s1942, 2
          %s1945 = ssub.s32 2048, %s1943
          %1946 = vsyncadd %s1931, %s1945
          %p1947 = scmp.ne.s32.totalorder 0, %s1943
          %s1948 = smul.addr %s1938, 2
          %s1949 = smul.addr %s1948, 64
          %s1950 = scalar_lea.hbm %s5, %s1949
          %s1951 = smul.u32 8, %s1941
          %s1952 = sshll.u32 %s1934, 4
          %s1953 = int_to_ptr.vmem [resolvable:$true] %s1952
          %s1954 = sshll.u32 %s1951, 4
          %1958 = dma.vmem_to_hbm [thread:$0]  (%p1947), %s1953, %s1954, %s1950, %s1931, 128, 128, 8
        $region56: #{tpu_custom_call.1} parent=39 // pred_fallthru
          _
      $region40: #{tpu_custom_call.1} parent=5 // pred_fallthru
        _
      %p1959 = scmp.le.s32.totalorder 2, %s18
      // Predicated region
      $region57: #{tpu_custom_call.1} parent=5 // pred_check
        %p1960 = pneg %p1959
      $region58: #{tpu_custom_call.1} parent=5 // pred_check_branch
        %1962 = sbr.rel (%p1960) target = $region60
      $region59: #{tpu_custom_call.1} parent=5 // pred_region
        %s1963 = ssub.s32 %s18, 2
        // Predicated region
        $region61: #{tpu_custom_call.1} parent=59 // pred_check
          %p1964 = pneg %p157
        $region62: #{tpu_custom_call.1} parent=59 // pred_check_branch
          %1966 = sbr.rel (%p1964) target = $region64
        $region63: #{tpu_custom_call.1} parent=59 // pred_region
          %s1967 = sand.u32 %s142, 1
          %s1968 = scalar_lea.sflag [#allocation4], %s1967
          %s1969 = sand.u32 %s142, 1
          %s1970 = smul.addr %s1969, 128
          %s1971 = scalar_lea.vmem [#allocation8], %s1970
          %1972 = dma.done %s1968, 2048
        $region64: #{tpu_custom_call.1} parent=59 // pred_fallthru
          _
      $region60: #{tpu_custom_call.1} parent=5 // pred_fallthru
        _
    $region6: #{tpu_custom_call.1} parent=1 // loop_footer
      %s22 = sadd.s32 1, %s18
    $region7: #{tpu_custom_call.1} parent=1 // loop_footer_branch
      %17 = sbr.rel target = $region3
    $region8: #{tpu_custom_call.1} parent=1 // loop_exit
      _
    %1973 = vsyncpa [#allocation3], 1
    %s1974 = scalar_lea.sflag [#allocation3], 1
    %1975 = vsyncpa %s1974, 1
    %1976 = vsyncpa [#allocation6], 1
    %1977 = vsyncpa [#allocation4], 1
    %s1978 = scalar_lea.sflag [#allocation4], 1
    %1979 = vsyncpa %s1978, 1

</llo_original>
